<compile_context>
chip_gen: v7x
topology: tpu7x:2x2x1
jax: 0.10.0
libtpu: 0.0.40
codegen_flags: <defaults>
</compile_context>

<pallas_src>
import functools

import jax
import jax.numpy as jnp
from jax import lax
from jax.experimental import pallas as pl
from jax.experimental.pallas import tpu as pltpu

TIME_EMBED = 32


# ----------------------------------------------------------------------------------
# In-kernel helpers (operate on (C, N*L) f32 values, batch folded into lanes)
# ----------------------------------------------------------------------------------
def _conv3_flat(x, w_ref, b_ref, left_edge, right_edge):
    """'same'-padded 1-D conv (k=3) as ONE matmul on an im2col tap stack.

    x:      (C_in, NL) f32, NL = N*L (batch folded into lanes)
    w_ref:  (C_out, 3*C_in) — tap-major: [w[:, :, 0] | w[:, :, 1] | w[:, :, 2]]
    b_ref:  (C_out, 1)
    left_edge / right_edge: (1, NL) bool — first / last column of each sample;
        used to zero the k=3 halo so adjacent samples don't leak into each other.
    """
    cin, nl = x.shape
    zcol = jnp.zeros((cin, 1), x.dtype)
    # x[:, l-1] and x[:, l+1] (built by slice+shift, zeroing folded into the stack
    # build via the sample-boundary masks — column 0 / NL-1 are covered by the mask).
    xm = jnp.where(left_edge, 0.0, jnp.concatenate([zcol, x[:, : nl - 1]], axis=1))
    xp = jnp.where(right_edge, 0.0, jnp.concatenate([x[:, 1:], zcol], axis=1))
    stack = jnp.concatenate([xm, x, xp], axis=0)  # (3*C_in, NL) im2col tap stack
    return jnp.dot(w_ref[...], stack, preferred_element_type=jnp.float32) + b_ref[...]


def _bottom_layer(t, x, w, left_edge, right_edge):
    """One SingleSignalBottomLayer on (C, NL) values.  w = 10 weight/bias refs."""
    wS, bS, wR1, bR1, wR2, bR2, wE, bE, wA, bA = w
    relu = lambda v: jnp.maximum(v, 0.0)

    # ConvS + ReLU
    s = relu(_conv3_flat(x, wS, bS, left_edge, right_edge))
    # ConvRes( cat([timeEmbed, s], channels) )  — channel concat done in VMEM
    r = relu(_conv3_flat(jnp.concatenate([t, s], axis=0), wR1, bR1, left_edge, right_edge))
    r = _conv3_flat(r, wR2, bR2, left_edge, right_edge)
    # forward_1 = ReLU(ConvS_out + ConvRes_out)
    f1 = relu(s + r)
    # attentionBlock, then ConvE(f1 + attn) + ReLU
    a = relu(_conv3_flat(f1, wA, bA, left_edge, right_edge))
    return relu(_conv3_flat(f1 + a, wE, bE, left_edge, right_edge))


def _fused_up_kernel(*refs, L):
    """Fused SingleSignalUp: 5 activation refs, 30 weight refs, 1 output ref."""
    t_ref, init_ref, x1_ref, x2_ref, x3_ref = refs[:5]
    o_ref = refs[-1]
    w = refs[5:-1]
    w1, w2, w3 = w[:10], w[10:20], w[20:30]

    t = t_ref[...]                       # (TIME_EMBED, NL)
    nl = t.shape[1]
    n = nl // L

    # Sample-boundary masks (computed once, reused by all 15 convs).
    col = lax.broadcasted_iota(jnp.int32, (1, nl), 1)
    left_edge = col == 0
    right_edge = col == (L - 1)
    for b in range(1, n):
        left_edge = left_edge | (col == b * L)
        right_edge = right_edge | (col == b * L + L - 1)

    # Decoder 1:  cat([initial, x1]) -> bottom layer
    f0 = jnp.concatenate([init_ref[...], x1_ref[...]], axis=0)
    f1 = _bottom_layer(t, f0, w1, left_edge, right_edge)
    # Decoder 2:  cat([f1, x2]) -> bottom layer
    f1 = jnp.concatenate([f1, x2_ref[...]], axis=0)
    f2 = _bottom_layer(t, f1, w2, left_edge, right_edge)
    # Decoder 3:  cat([f2, x3]) -> bottom layer
    f2 = jnp.concatenate([f2, x3_ref[...]], axis=0)
    o_ref[...] = _bottom_layer(t, f2, w3, left_edge, right_edge)


# ----------------------------------------------------------------------------------
# Wrapper: layout plumbing ( (N,C,L) <-> (C, N*L) ), weight flattening, pallas_call
# ----------------------------------------------------------------------------------
def single_signal_up(time_embed, initial, x1, x2, x3, params):
    """time_embed: (N, 32, L); initial/x1/x2/x3: (N, C, L).  Returns (N, C_out, L)."""
    N, _, L = time_embed.shape

    def fold(a):                                    # (N, C, L) -> (C, N*L)
        return jnp.transpose(a, (1, 0, 2)).reshape(a.shape[1], N * L)

    def wflat(w):                                   # (C_out, C_in, 3) -> (C_out, 3*C_in)
        co, ci, k = w.shape
        return jnp.transpose(w, (0, 2, 1)).reshape(co, k * ci)

    acts = [fold(time_embed), fold(initial), fold(x1), fold(x2), fold(x3)]
    w_args = []
    for d in ("dec1", "dec2", "dec3"):
        p = params[d]
        for name in ("S", "R1", "R2", "E", "A"):
            w_args.append(wflat(p["w" + name]))
            w_args.append(p["b" + name].reshape(-1, 1))

    cout = params["dec3"]["wS"].shape[0]

    # Single gridless call: every operand is a whole-array VMEM block (tiny here).
    # For large L / N: tile N*L across a 'parallel' grid axis with a 1-col halo so
    # both v7x TensorCores get work and VMEM stays bounded (64 MiB on v7x).
    out2d = pl.pallas_call(
        functools.partial(_fused_up_kernel, L=L),
        out_shape=jax.ShapeDtypeStruct((cout, N * L), jnp.float32),
    )(*acts, *w_args)

    return jnp.transpose(out2d.reshape(cout, N, L), (1, 0, 2))


# ----------------------------------------------------------------------------------
# Deterministic parameter init (PyTorch Conv1d-style uniform bounds, synthetic)
# ----------------------------------------------------------------------------------
def _init_conv(key, cout, cin, k=3):
    kw, kb = jax.random.split(key)
    bound = (cin * k) ** -0.5
    w = jax.random.uniform(kw, (cout, cin, k), jnp.float32, -bound, bound)
    b = jax.random.uniform(kb, (cout,), jnp.float32, -bound, bound)
    return w, b


def init_bottom(key, in_dim, out_dim):
    ks = jax.random.split(key, 5)
    wS, bS = _init_conv(ks[0], out_dim, in_dim)
    wR1, bR1 = _init_conv(ks[1], out_dim, out_dim + TIME_EMBED)   # acts on cat([t, s])
    wR2, bR2 = _init_conv(ks[2], out_dim, out_dim)
    wE, bE = _init_conv(ks[3], out_dim, out_dim)
    wA, bA = _init_conv(ks[4], out_dim, out_dim)
    return dict(wS=wS, bS=bS, wR1=wR1, bR1=bR1, wR2=wR2, bR2=bR2,
                wE=wE, bE=bE, wA=wA, bA=bA)


# ----------------------------------------------------------------------------------
# Pure-JAX reference (lax.conv_general_dilated) for the correctness check
# ----------------------------------------------------------------------------------
def _conv1d_ref(x, w, b):
    y = lax.conv_general_dilated(x, w, window_strides=(1,), padding=[(1, 1)],
                                 dimension_numbers=("NCH", "OIH", "NCH"))
    return y + b[None, :, None]


def bottom_layer_ref(t, x, p):
    relu = jax.nn.relu
    s = relu(_conv1d_ref(x, p["wS"], p["bS"]))
    r = relu(_conv1d_ref(jnp.concatenate([t, s], axis=1), p["wR1"], p["bR1"]))
    r = _conv1d_ref(r, p["wR2"], p["bR2"])
    f1 = relu(s + r)
    a = relu(_conv1d_ref(f1, p["wA"], p["bA"]))
    return relu(_conv1d_ref(f1 + a, p["wE"], p["bE"]))


def single_signal_up_ref(time_embed, initial, x1, x2, x3, params):
    f0 = jnp.concatenate([initial, x1], axis=1)
    f1 = bottom_layer_ref(time_embed, f0, params["dec1"])
    f1 = jnp.concatenate([f1, x2], axis=1)
    f2 = bottom_layer_ref(time_embed, f1, params["dec2"])
    f2 = jnp.concatenate([f2, x3], axis=1)
    return bottom_layer_ref(time_embed, f2, params["dec3"])


# ----------------------------------------------------------------------------------
if __name__ == "__main__":
    up_sample_dim = 32
    input_dims = [16, 16, 16]
    output_dims = [16, 16, 16]
    N, L = 2, 16

    key = jax.random.PRNGKey(0)
    k_p, k_t, k_i0, k_i1, k_i2, k_i3 = jax.random.split(key, 6)
    kp1, kp2, kp3 = jax.random.split(k_p, 3)

    params = dict(
        dec1=init_bottom(kp1, up_sample_dim + input_dims[2], output_dims[2]),
        dec2=init_bottom(kp2, input_dims[1] + output_dims[2], output_dims[1]),
        dec3=init_bottom(kp3, input_dims[0] + output_dims[1], output_dims[0]),
    )

    time_embed = jax.random.normal(k_t, (N, TIME_EMBED, L), jnp.float32)
    initial = jax.random.normal(k_i0, (N, up_sample_dim, L), jnp.float32)
    x1 = jax.random.normal(k_i1, (N, input_dims[2], L), jnp.float32)
    x2 = jax.random.normal(k_i2, (N, input_dims[1], L), jnp.float32)
    x3 = jax.random.normal(k_i3, (N, input_dims[0], L), jnp.float32)

    fwd = jax.jit(single_signal_up)
    out = jax.block_until_ready(fwd(time_embed, initial, x1, x2, x3, params))

    ref = single_signal_up_ref(time_embed, initial, x1, x2, x3, params)
    assert out.shape == (N, output_dims[0], L), out.shape
    max_err = float(jnp.max(jnp.abs(out - ref)))
    assert jnp.allclose(out, ref, atol=1e-4, rtol=1e-4), max_err

    print("KERNEL_OK")
</pallas_src>

<mosaic_0001>
module attributes {stable_mosaic.version = 11 : i64} {
  func.func @_fused_up_kernel(%arg0: memref<32x32xf32, #tpu.memory_space<vmem>>, %arg1: memref<32x32xf32, #tpu.memory_space<vmem>>, %arg2: memref<16x32xf32, #tpu.memory_space<vmem>>, %arg3: memref<16x32xf32, #tpu.memory_space<vmem>>, %arg4: memref<16x32xf32, #tpu.memory_space<vmem>>, %arg5: memref<16x144xf32, #tpu.memory_space<vmem>>, %arg6: memref<16x1xf32, #tpu.memory_space<vmem>>, %arg7: memref<16x144xf32, #tpu.memory_space<vmem>>, %arg8: memref<16x1xf32, #tpu.memory_space<vmem>>, %arg9: memref<16x48xf32, #tpu.memory_space<vmem>>, %arg10: memref<16x1xf32, #tpu.memory_space<vmem>>, %arg11: memref<16x48xf32, #tpu.memory_space<vmem>>, %arg12: memref<16x1xf32, #tpu.memory_space<vmem>>, %arg13: memref<16x48xf32, #tpu.memory_space<vmem>>, %arg14: memref<16x1xf32, #tpu.memory_space<vmem>>, %arg15: memref<16x96xf32, #tpu.memory_space<vmem>>, %arg16: memref<16x1xf32, #tpu.memory_space<vmem>>, %arg17: memref<16x144xf32, #tpu.memory_space<vmem>>, %arg18: memref<16x1xf32, #tpu.memory_space<vmem>>, %arg19: memref<16x48xf32, #tpu.memory_space<vmem>>, %arg20: memref<16x1xf32, #tpu.memory_space<vmem>>, %arg21: memref<16x48xf32, #tpu.memory_space<vmem>>, %arg22: memref<16x1xf32, #tpu.memory_space<vmem>>, %arg23: memref<16x48xf32, #tpu.memory_space<vmem>>, %arg24: memref<16x1xf32, #tpu.memory_space<vmem>>, %arg25: memref<16x96xf32, #tpu.memory_space<vmem>>, %arg26: memref<16x1xf32, #tpu.memory_space<vmem>>, %arg27: memref<16x144xf32, #tpu.memory_space<vmem>>, %arg28: memref<16x1xf32, #tpu.memory_space<vmem>>, %arg29: memref<16x48xf32, #tpu.memory_space<vmem>>, %arg30: memref<16x1xf32, #tpu.memory_space<vmem>>, %arg31: memref<16x48xf32, #tpu.memory_space<vmem>>, %arg32: memref<16x1xf32, #tpu.memory_space<vmem>>, %arg33: memref<16x48xf32, #tpu.memory_space<vmem>>, %arg34: memref<16x1xf32, #tpu.memory_space<vmem>>, %arg35: memref<16x32xf32, #tpu.memory_space<vmem>>) attributes {dimension_semantics = [], scalar_prefetch = 0 : i64, scratch_operands = 0 : i64, tpu.core_type = #tpu.core_type<tc>} {
    %c0 = arith.constant 0 : index
    %c0_0 = arith.constant 0 : index
    %0 = vector.load %arg0[%c0, %c0_0] : memref<32x32xf32, #tpu.memory_space<vmem>>, vector<32x32xf32>
    %1 = tpu.iota {dimensions = array<i32: 1>} : vector<1x32xi32>
    %c0_i32 = arith.constant 0 : i32
    %2 = vector.broadcast %c0_i32 : i32 to vector<1x32xi32>
    %3 = arith.cmpi eq, %1, %2 : vector<1x32xi32>
    %c15_i32 = arith.constant 15 : i32
    %4 = vector.broadcast %c15_i32 : i32 to vector<1x32xi32>
    %5 = arith.cmpi eq, %1, %4 : vector<1x32xi32>
    %c16_i32 = arith.constant 16 : i32
    %6 = vector.broadcast %c16_i32 : i32 to vector<1x32xi32>
    %7 = arith.cmpi eq, %1, %6 : vector<1x32xi32>
    %8 = arith.ori %3, %7 : vector<1x32xi1>
    %c31_i32 = arith.constant 31 : i32
    %9 = vector.broadcast %c31_i32 : i32 to vector<1x32xi32>
    %10 = arith.cmpi eq, %1, %9 : vector<1x32xi32>
    %11 = arith.ori %5, %10 : vector<1x32xi1>
    %c0_1 = arith.constant 0 : index
    %c0_2 = arith.constant 0 : index
    %12 = vector.load %arg1[%c0_1, %c0_2] : memref<32x32xf32, #tpu.memory_space<vmem>>, vector<32x32xf32>
    %c0_3 = arith.constant 0 : index
    %c0_4 = arith.constant 0 : index
    %13 = vector.load %arg2[%c0_3, %c0_4] : memref<16x32xf32, #tpu.memory_space<vmem>>, vector<16x32xf32>
    %14 = tpu.concatenate %12, %13 in 0 : vector<32x32xf32>, vector<16x32xf32> -> vector<48x32xf32>
    %cst = arith.constant 0.000000e+00 : f32
    %15 = vector.broadcast %cst : f32 to vector<48x1xf32>
    %16 = vector.extract_strided_slice %14 {offsets = [0, 0], sizes = [48, 31], strides = [1, 1]} : vector<48x32xf32> to vector<48x31xf32>
    %17 = tpu.concatenate %15, %16 in 1 : vector<48x1xf32>, vector<48x31xf32> -> vector<48x32xf32>
    %cst_5 = arith.constant 0.000000e+00 : f32
    %18 = vector.shape_cast %8 : vector<1x32xi1> to vector<1x32xi1>
    %19 = vector.broadcast %18 : vector<1x32xi1> to vector<48x32xi1>
    %20 = vector.broadcast %cst_5 : f32 to vector<48x32xf32>
    %21 = arith.select %19, %20, %17 : vector<48x32xi1>, vector<48x32xf32>
    %22 = vector.extract_strided_slice %14 {offsets = [0, 1], sizes = [48, 31], strides = [1, 1]} : vector<48x32xf32> to vector<48x31xf32>
    %23 = tpu.concatenate %22, %15 in 1 : vector<48x31xf32>, vector<48x1xf32> -> vector<48x32xf32>
    %cst_6 = arith.constant 0.000000e+00 : f32
    %24 = vector.shape_cast %11 : vector<1x32xi1> to vector<1x32xi1>
    %25 = vector.broadcast %24 : vector<1x32xi1> to vector<48x32xi1>
    %26 = vector.broadcast %cst_6 : f32 to vector<48x32xf32>
    %27 = arith.select %25, %26, %23 : vector<48x32xi1>, vector<48x32xf32>
    %28 = tpu.concatenate %21, %14, %27 in 0 : vector<48x32xf32>, vector<48x32xf32>, vector<48x32xf32> -> vector<144x32xf32>
    %c0_7 = arith.constant 0 : index
    %c0_8 = arith.constant 0 : index
    %29 = vector.load %arg5[%c0_7, %c0_8] : memref<16x144xf32, #tpu.memory_space<vmem>>, vector<16x144xf32>
    %cst_9 = arith.constant dense<0.000000e+00> : vector<16x32xf32>
    %30 = tpu.matmul %29, %28, %cst_9 {dimension_numbers = #tpu.dot_dimension_numbers<[1], [0], [0], [1], [0, 0, 1, 1], [], []>} : vector<16x144xf32>, vector<144x32xf32>, vector<16x32xf32> -> vector<16x32xf32>
    %c0_10 = arith.constant 0 : index
    %c0_11 = arith.constant 0 : index
    %31 = vector.load %arg6[%c0_10, %c0_11] : memref<16x1xf32, #tpu.memory_space<vmem>>, vector<16x1xf32>
    %32 = vector.broadcast %31 : vector<16x1xf32> to vector<16x32xf32>
    %33 = arith.addf %30, %32 : vector<16x32xf32>
    %cst_12 = arith.constant 0.000000e+00 : f32
    %34 = vector.broadcast %cst_12 : f32 to vector<16x32xf32>
    %35 = arith.maximumf %33, %34 : vector<16x32xf32>
    %36 = tpu.concatenate %0, %35 in 0 : vector<32x32xf32>, vector<16x32xf32> -> vector<48x32xf32>
    %cst_13 = arith.constant 0.000000e+00 : f32
    %37 = vector.broadcast %cst_13 : f32 to vector<48x1xf32>
    %38 = vector.extract_strided_slice %36 {offsets = [0, 0], sizes = [48, 31], strides = [1, 1]} : vector<48x32xf32> to vector<48x31xf32>
    %39 = tpu.concatenate %37, %38 in 1 : vector<48x1xf32>, vector<48x31xf32> -> vector<48x32xf32>
    %cst_14 = arith.constant 0.000000e+00 : f32
    %40 = vector.shape_cast %8 : vector<1x32xi1> to vector<1x32xi1>
    %41 = vector.broadcast %40 : vector<1x32xi1> to vector<48x32xi1>
    %42 = vector.broadcast %cst_14 : f32 to vector<48x32xf32>
    %43 = arith.select %41, %42, %39 : vector<48x32xi1>, vector<48x32xf32>
    %44 = vector.extract_strided_slice %36 {offsets = [0, 1], sizes = [48, 31], strides = [1, 1]} : vector<48x32xf32> to vector<48x31xf32>
    %45 = tpu.concatenate %44, %37 in 1 : vector<48x31xf32>, vector<48x1xf32> -> vector<48x32xf32>
    %cst_15 = arith.constant 0.000000e+00 : f32
    %46 = vector.shape_cast %11 : vector<1x32xi1> to vector<1x32xi1>
    %47 = vector.broadcast %46 : vector<1x32xi1> to vector<48x32xi1>
    %48 = vector.broadcast %cst_15 : f32 to vector<48x32xf32>
    %49 = arith.select %47, %48, %45 : vector<48x32xi1>, vector<48x32xf32>
    %50 = tpu.concatenate %43, %36, %49 in 0 : vector<48x32xf32>, vector<48x32xf32>, vector<48x32xf32> -> vector<144x32xf32>
    %c0_16 = arith.constant 0 : index
    %c0_17 = arith.constant 0 : index
    %51 = vector.load %arg7[%c0_16, %c0_17] : memref<16x144xf32, #tpu.memory_space<vmem>>, vector<16x144xf32>
    %cst_18 = arith.constant dense<0.000000e+00> : vector<16x32xf32>
    %52 = tpu.matmul %51, %50, %cst_18 {dimension_numbers = #tpu.dot_dimension_numbers<[1], [0], [0], [1], [0, 0, 1, 1], [], []>} : vector<16x144xf32>, vector<144x32xf32>, vector<16x32xf32> -> vector<16x32xf32>
    %c0_19 = arith.constant 0 : index
    %c0_20 = arith.constant 0 : index
    %53 = vector.load %arg8[%c0_19, %c0_20] : memref<16x1xf32, #tpu.memory_space<vmem>>, vector<16x1xf32>
    %54 = vector.broadcast %53 : vector<16x1xf32> to vector<16x32xf32>
    %55 = arith.addf %52, %54 : vector<16x32xf32>
    %cst_21 = arith.constant 0.000000e+00 : f32
    %56 = vector.broadcast %cst_21 : f32 to vector<16x32xf32>
    %57 = arith.maximumf %55, %56 : vector<16x32xf32>
    %cst_22 = arith.constant 0.000000e+00 : f32
    %58 = vector.broadcast %cst_22 : f32 to vector<16x1xf32>
    %59 = vector.extract_strided_slice %57 {offsets = [0, 0], sizes = [16, 31], strides = [1, 1]} : vector<16x32xf32> to vector<16x31xf32>
    %60 = tpu.concatenate %58, %59 in 1 : vector<16x1xf32>, vector<16x31xf32> -> vector<16x32xf32>
    %cst_23 = arith.constant 0.000000e+00 : f32
    %61 = vector.shape_cast %8 : vector<1x32xi1> to vector<1x32xi1>
    %62 = vector.broadcast %61 : vector<1x32xi1> to vector<16x32xi1>
    %63 = vector.broadcast %cst_23 : f32 to vector<16x32xf32>
    %64 = arith.select %62, %63, %60 : vector<16x32xi1>, vector<16x32xf32>
    %65 = vector.extract_strided_slice %57 {offsets = [0, 1], sizes = [16, 31], strides = [1, 1]} : vector<16x32xf32> to vector<16x31xf32>
    %66 = tpu.concatenate %65, %58 in 1 : vector<16x31xf32>, vector<16x1xf32> -> vector<16x32xf32>
    %cst_24 = arith.constant 0.000000e+00 : f32
    %67 = vector.shape_cast %11 : vector<1x32xi1> to vector<1x32xi1>
    %68 = vector.broadcast %67 : vector<1x32xi1> to vector<16x32xi1>
    %69 = vector.broadcast %cst_24 : f32 to vector<16x32xf32>
    %70 = arith.select %68, %69, %66 : vector<16x32xi1>, vector<16x32xf32>
    %71 = tpu.concatenate %64, %57, %70 in 0 : vector<16x32xf32>, vector<16x32xf32>, vector<16x32xf32> -> vector<48x32xf32>
    %c0_25 = arith.constant 0 : index
    %c0_26 = arith.constant 0 : index
    %72 = vector.load %arg9[%c0_25, %c0_26] : memref<16x48xf32, #tpu.memory_space<vmem>>, vector<16x48xf32>
    %cst_27 = arith.constant dense<0.000000e+00> : vector<16x32xf32>
    %73 = tpu.matmul %72, %71, %cst_27 {dimension_numbers = #tpu.dot_dimension_numbers<[1], [0], [0], [1], [0, 0, 1, 1], [], []>} : vector<16x48xf32>, vector<48x32xf32>, vector<16x32xf32> -> vector<16x32xf32>
    %c0_28 = arith.constant 0 : index
    %c0_29 = arith.constant 0 : index
    %74 = vector.load %arg10[%c0_28, %c0_29] : memref<16x1xf32, #tpu.memory_space<vmem>>, vector<16x1xf32>
    %75 = vector.broadcast %74 : vector<16x1xf32> to vector<16x32xf32>
    %76 = arith.addf %73, %75 : vector<16x32xf32>
    %77 = arith.addf %35, %76 : vector<16x32xf32>
    %cst_30 = arith.constant 0.000000e+00 : f32
    %78 = vector.broadcast %cst_30 : f32 to vector<16x32xf32>
    %79 = arith.maximumf %77, %78 : vector<16x32xf32>
    %cst_31 = arith.constant 0.000000e+00 : f32
    %80 = vector.broadcast %cst_31 : f32 to vector<16x1xf32>
    %81 = vector.extract_strided_slice %79 {offsets = [0, 0], sizes = [16, 31], strides = [1, 1]} : vector<16x32xf32> to vector<16x31xf32>
    %82 = tpu.concatenate %80, %81 in 1 : vector<16x1xf32>, vector<16x31xf32> -> vector<16x32xf32>
    %cst_32 = arith.constant 0.000000e+00 : f32
    %83 = vector.shape_cast %8 : vector<1x32xi1> to vector<1x32xi1>
    %84 = vector.broadcast %83 : vector<1x32xi1> to vector<16x32xi1>
    %85 = vector.broadcast %cst_32 : f32 to vector<16x32xf32>
    %86 = arith.select %84, %85, %82 : vector<16x32xi1>, vector<16x32xf32>
    %87 = vector.extract_strided_slice %79 {offsets = [0, 1], sizes = [16, 31], strides = [1, 1]} : vector<16x32xf32> to vector<16x31xf32>
    %88 = tpu.concatenate %87, %80 in 1 : vector<16x31xf32>, vector<16x1xf32> -> vector<16x32xf32>
    %cst_33 = arith.constant 0.000000e+00 : f32
    %89 = vector.shape_cast %11 : vector<1x32xi1> to vector<1x32xi1>
    %90 = vector.broadcast %89 : vector<1x32xi1> to vector<16x32xi1>
    %91 = vector.broadcast %cst_33 : f32 to vector<16x32xf32>
    %92 = arith.select %90, %91, %88 : vector<16x32xi1>, vector<16x32xf32>
    %93 = tpu.concatenate %86, %79, %92 in 0 : vector<16x32xf32>, vector<16x32xf32>, vector<16x32xf32> -> vector<48x32xf32>
    %c0_34 = arith.constant 0 : index
    %c0_35 = arith.constant 0 : index
    %94 = vector.load %arg13[%c0_34, %c0_35] : memref<16x48xf32, #tpu.memory_space<vmem>>, vector<16x48xf32>
    %cst_36 = arith.constant dense<0.000000e+00> : vector<16x32xf32>
    %95 = tpu.matmul %94, %93, %cst_36 {dimension_numbers = #tpu.dot_dimension_numbers<[1], [0], [0], [1], [0, 0, 1, 1], [], []>} : vector<16x48xf32>, vector<48x32xf32>, vector<16x32xf32> -> vector<16x32xf32>
    %c0_37 = arith.constant 0 : index
    %c0_38 = arith.constant 0 : index
    %96 = vector.load %arg14[%c0_37, %c0_38] : memref<16x1xf32, #tpu.memory_space<vmem>>, vector<16x1xf32>
    %97 = vector.broadcast %96 : vector<16x1xf32> to vector<16x32xf32>
    %98 = arith.addf %95, %97 : vector<16x32xf32>
    %cst_39 = arith.constant 0.000000e+00 : f32
    %99 = vector.broadcast %cst_39 : f32 to vector<16x32xf32>
    %100 = arith.maximumf %98, %99 : vector<16x32xf32>
    %101 = arith.addf %79, %100 : vector<16x32xf32>
    %cst_40 = arith.constant 0.000000e+00 : f32
    %102 = vector.broadcast %cst_40 : f32 to vector<16x1xf32>
    %103 = vector.extract_strided_slice %101 {offsets = [0, 0], sizes = [16, 31], strides = [1, 1]} : vector<16x32xf32> to vector<16x31xf32>
    %104 = tpu.concatenate %102, %103 in 1 : vector<16x1xf32>, vector<16x31xf32> -> vector<16x32xf32>
    %cst_41 = arith.constant 0.000000e+00 : f32
    %105 = vector.shape_cast %8 : vector<1x32xi1> to vector<1x32xi1>
    %106 = vector.broadcast %105 : vector<1x32xi1> to vector<16x32xi1>
    %107 = vector.broadcast %cst_41 : f32 to vector<16x32xf32>
    %108 = arith.select %106, %107, %104 : vector<16x32xi1>, vector<16x32xf32>
    %109 = vector.extract_strided_slice %101 {offsets = [0, 1], sizes = [16, 31], strides = [1, 1]} : vector<16x32xf32> to vector<16x31xf32>
    %110 = tpu.concatenate %109, %102 in 1 : vector<16x31xf32>, vector<16x1xf32> -> vector<16x32xf32>
    %cst_42 = arith.constant 0.000000e+00 : f32
    %111 = vector.shape_cast %11 : vector<1x32xi1> to vector<1x32xi1>
    %112 = vector.broadcast %111 : vector<1x32xi1> to vector<16x32xi1>
    %113 = vector.broadcast %cst_42 : f32 to vector<16x32xf32>
    %114 = arith.select %112, %113, %110 : vector<16x32xi1>, vector<16x32xf32>
    %115 = tpu.concatenate %108, %101, %114 in 0 : vector<16x32xf32>, vector<16x32xf32>, vector<16x32xf32> -> vector<48x32xf32>
    %c0_43 = arith.constant 0 : index
    %c0_44 = arith.constant 0 : index
    %116 = vector.load %arg11[%c0_43, %c0_44] : memref<16x48xf32, #tpu.memory_space<vmem>>, vector<16x48xf32>
    %cst_45 = arith.constant dense<0.000000e+00> : vector<16x32xf32>
    %117 = tpu.matmul %116, %115, %cst_45 {dimension_numbers = #tpu.dot_dimension_numbers<[1], [0], [0], [1], [0, 0, 1, 1], [], []>} : vector<16x48xf32>, vector<48x32xf32>, vector<16x32xf32> -> vector<16x32xf32>
    %c0_46 = arith.constant 0 : index
    %c0_47 = arith.constant 0 : index
    %118 = vector.load %arg12[%c0_46, %c0_47] : memref<16x1xf32, #tpu.memory_space<vmem>>, vector<16x1xf32>
    %119 = vector.broadcast %118 : vector<16x1xf32> to vector<16x32xf32>
    %120 = arith.addf %117, %119 : vector<16x32xf32>
    %cst_48 = arith.constant 0.000000e+00 : f32
    %121 = vector.broadcast %cst_48 : f32 to vector<16x32xf32>
    %122 = arith.maximumf %120, %121 : vector<16x32xf32>
    %c0_49 = arith.constant 0 : index
    %c0_50 = arith.constant 0 : index
    %123 = vector.load %arg3[%c0_49, %c0_50] : memref<16x32xf32, #tpu.memory_space<vmem>>, vector<16x32xf32>
    %124 = tpu.concatenate %122, %123 in 0 : vector<16x32xf32>, vector<16x32xf32> -> vector<32x32xf32>
    %cst_51 = arith.constant 0.000000e+00 : f32
    %125 = vector.broadcast %cst_51 : f32 to vector<32x1xf32>
    %126 = vector.extract_strided_slice %124 {offsets = [0, 0], sizes = [32, 31], strides = [1, 1]} : vector<32x32xf32> to vector<32x31xf32>
    %127 = tpu.concatenate %125, %126 in 1 : vector<32x1xf32>, vector<32x31xf32> -> vector<32x32xf32>
    %cst_52 = arith.constant 0.000000e+00 : f32
    %128 = vector.shape_cast %8 : vector<1x32xi1> to vector<1x32xi1>
    %129 = vector.broadcast %128 : vector<1x32xi1> to vector<32x32xi1>
    %130 = vector.broadcast %cst_52 : f32 to vector<32x32xf32>
    %131 = arith.select %129, %130, %127 : vector<32x32xi1>, vector<32x32xf32>
    %132 = vector.extract_strided_slice %124 {offsets = [0, 1], sizes = [32, 31], strides = [1, 1]} : vector<32x32xf32> to vector<32x31xf32>
    %133 = tpu.concatenate %132, %125 in 1 : vector<32x31xf32>, vector<32x1xf32> -> vector<32x32xf32>
    %cst_53 = arith.constant 0.000000e+00 : f32
    %134 = vector.shape_cast %11 : vector<1x32xi1> to vector<1x32xi1>
    %135 = vector.broadcast %134 : vector<1x32xi1> to vector<32x32xi1>
    %136 = vector.broadcast %cst_53 : f32 to vector<32x32xf32>
    %137 = arith.select %135, %136, %133 : vector<32x32xi1>, vector<32x32xf32>
    %138 = tpu.concatenate %131, %124, %137 in 0 : vector<32x32xf32>, vector<32x32xf32>, vector<32x32xf32> -> vector<96x32xf32>
    %c0_54 = arith.constant 0 : index
    %c0_55 = arith.constant 0 : index
    %139 = vector.load %arg15[%c0_54, %c0_55] : memref<16x96xf32, #tpu.memory_space<vmem>>, vector<16x96xf32>
    %cst_56 = arith.constant dense<0.000000e+00> : vector<16x32xf32>
    %140 = tpu.matmul %139, %138, %cst_56 {dimension_numbers = #tpu.dot_dimension_numbers<[1], [0], [0], [1], [0, 0, 1, 1], [], []>} : vector<16x96xf32>, vector<96x32xf32>, vector<16x32xf32> -> vector<16x32xf32>
    %c0_57 = arith.constant 0 : index
    %c0_58 = arith.constant 0 : index
    %141 = vector.load %arg16[%c0_57, %c0_58] : memref<16x1xf32, #tpu.memory_space<vmem>>, vector<16x1xf32>
    %142 = vector.broadcast %141 : vector<16x1xf32> to vector<16x32xf32>
    %143 = arith.addf %140, %142 : vector<16x32xf32>
    %cst_59 = arith.constant 0.000000e+00 : f32
    %144 = vector.broadcast %cst_59 : f32 to vector<16x32xf32>
    %145 = arith.maximumf %143, %144 : vector<16x32xf32>
    %146 = tpu.concatenate %0, %145 in 0 : vector<32x32xf32>, vector<16x32xf32> -> vector<48x32xf32>
    %cst_60 = arith.constant 0.000000e+00 : f32
    %147 = vector.broadcast %cst_60 : f32 to vector<48x1xf32>
    %148 = vector.extract_strided_slice %146 {offsets = [0, 0], sizes = [48, 31], strides = [1, 1]} : vector<48x32xf32> to vector<48x31xf32>
    %149 = tpu.concatenate %147, %148 in 1 : vector<48x1xf32>, vector<48x31xf32> -> vector<48x32xf32>
    %cst_61 = arith.constant 0.000000e+00 : f32
    %150 = vector.shape_cast %8 : vector<1x32xi1> to vector<1x32xi1>
    %151 = vector.broadcast %150 : vector<1x32xi1> to vector<48x32xi1>
    %152 = vector.broadcast %cst_61 : f32 to vector<48x32xf32>
    %153 = arith.select %151, %152, %149 : vector<48x32xi1>, vector<48x32xf32>
    %154 = vector.extract_strided_slice %146 {offsets = [0, 1], sizes = [48, 31], strides = [1, 1]} : vector<48x32xf32> to vector<48x31xf32>
    %155 = tpu.concatenate %154, %147 in 1 : vector<48x31xf32>, vector<48x1xf32> -> vector<48x32xf32>
    %cst_62 = arith.constant 0.000000e+00 : f32
    %156 = vector.shape_cast %11 : vector<1x32xi1> to vector<1x32xi1>
    %157 = vector.broadcast %156 : vector<1x32xi1> to vector<48x32xi1>
    %158 = vector.broadcast %cst_62 : f32 to vector<48x32xf32>
    %159 = arith.select %157, %158, %155 : vector<48x32xi1>, vector<48x32xf32>
    %160 = tpu.concatenate %153, %146, %159 in 0 : vector<48x32xf32>, vector<48x32xf32>, vector<48x32xf32> -> vector<144x32xf32>
    %c0_63 = arith.constant 0 : index
    %c0_64 = arith.constant 0 : index
    %161 = vector.load %arg17[%c0_63, %c0_64] : memref<16x144xf32, #tpu.memory_space<vmem>>, vector<16x144xf32>
    %cst_65 = arith.constant dense<0.000000e+00> : vector<16x32xf32>
    %162 = tpu.matmul %161, %160, %cst_65 {dimension_numbers = #tpu.dot_dimension_numbers<[1], [0], [0], [1], [0, 0, 1, 1], [], []>} : vector<16x144xf32>, vector<144x32xf32>, vector<16x32xf32> -> vector<16x32xf32>
    %c0_66 = arith.constant 0 : index
    %c0_67 = arith.constant 0 : index
    %163 = vector.load %arg18[%c0_66, %c0_67] : memref<16x1xf32, #tpu.memory_space<vmem>>, vector<16x1xf32>
    %164 = vector.broadcast %163 : vector<16x1xf32> to vector<16x32xf32>
    %165 = arith.addf %162, %164 : vector<16x32xf32>
    %cst_68 = arith.constant 0.000000e+00 : f32
    %166 = vector.broadcast %cst_68 : f32 to vector<16x32xf32>
    %167 = arith.maximumf %165, %166 : vector<16x32xf32>
    %cst_69 = arith.constant 0.000000e+00 : f32
    %168 = vector.broadcast %cst_69 : f32 to vector<16x1xf32>
    %169 = vector.extract_strided_slice %167 {offsets = [0, 0], sizes = [16, 31], strides = [1, 1]} : vector<16x32xf32> to vector<16x31xf32>
    %170 = tpu.concatenate %168, %169 in 1 : vector<16x1xf32>, vector<16x31xf32> -> vector<16x32xf32>
    %cst_70 = arith.constant 0.000000e+00 : f32
    %171 = vector.shape_cast %8 : vector<1x32xi1> to vector<1x32xi1>
    %172 = vector.broadcast %171 : vector<1x32xi1> to vector<16x32xi1>
    %173 = vector.broadcast %cst_70 : f32 to vector<16x32xf32>
    %174 = arith.select %172, %173, %170 : vector<16x32xi1>, vector<16x32xf32>
    %175 = vector.extract_strided_slice %167 {offsets = [0, 1], sizes = [16, 31], strides = [1, 1]} : vector<16x32xf32> to vector<16x31xf32>
    %176 = tpu.concatenate %175, %168 in 1 : vector<16x31xf32>, vector<16x1xf32> -> vector<16x32xf32>
    %cst_71 = arith.constant 0.000000e+00 : f32
    %177 = vector.shape_cast %11 : vector<1x32xi1> to vector<1x32xi1>
    %178 = vector.broadcast %177 : vector<1x32xi1> to vector<16x32xi1>
    %179 = vector.broadcast %cst_71 : f32 to vector<16x32xf32>
    %180 = arith.select %178, %179, %176 : vector<16x32xi1>, vector<16x32xf32>
    %181 = tpu.concatenate %174, %167, %180 in 0 : vector<16x32xf32>, vector<16x32xf32>, vector<16x32xf32> -> vector<48x32xf32>
    %c0_72 = arith.constant 0 : index
    %c0_73 = arith.constant 0 : index
    %182 = vector.load %arg19[%c0_72, %c0_73] : memref<16x48xf32, #tpu.memory_space<vmem>>, vector<16x48xf32>
    %cst_74 = arith.constant dense<0.000000e+00> : vector<16x32xf32>
    %183 = tpu.matmul %182, %181, %cst_74 {dimension_numbers = #tpu.dot_dimension_numbers<[1], [0], [0], [1], [0, 0, 1, 1], [], []>} : vector<16x48xf32>, vector<48x32xf32>, vector<16x32xf32> -> vector<16x32xf32>
    %c0_75 = arith.constant 0 : index
    %c0_76 = arith.constant 0 : index
    %184 = vector.load %arg20[%c0_75, %c0_76] : memref<16x1xf32, #tpu.memory_space<vmem>>, vector<16x1xf32>
    %185 = vector.broadcast %184 : vector<16x1xf32> to vector<16x32xf32>
    %186 = arith.addf %183, %185 : vector<16x32xf32>
    %187 = arith.addf %145, %186 : vector<16x32xf32>
    %cst_77 = arith.constant 0.000000e+00 : f32
    %188 = vector.broadcast %cst_77 : f32 to vector<16x32xf32>
    %189 = arith.maximumf %187, %188 : vector<16x32xf32>
    %cst_78 = arith.constant 0.000000e+00 : f32
    %190 = vector.broadcast %cst_78 : f32 to vector<16x1xf32>
    %191 = vector.extract_strided_slice %189 {offsets = [0, 0], sizes = [16, 31], strides = [1, 1]} : vector<16x32xf32> to vector<16x31xf32>
    %192 = tpu.concatenate %190, %191 in 1 : vector<16x1xf32>, vector<16x31xf32> -> vector<16x32xf32>
    %cst_79 = arith.constant 0.000000e+00 : f32
    %193 = vector.shape_cast %8 : vector<1x32xi1> to vector<1x32xi1>
    %194 = vector.broadcast %193 : vector<1x32xi1> to vector<16x32xi1>
    %195 = vector.broadcast %cst_79 : f32 to vector<16x32xf32>
    %196 = arith.select %194, %195, %192 : vector<16x32xi1>, vector<16x32xf32>
    %197 = vector.extract_strided_slice %189 {offsets = [0, 1], sizes = [16, 31], strides = [1, 1]} : vector<16x32xf32> to vector<16x31xf32>
    %198 = tpu.concatenate %197, %190 in 1 : vector<16x31xf32>, vector<16x1xf32> -> vector<16x32xf32>
    %cst_80 = arith.constant 0.000000e+00 : f32
    %199 = vector.shape_cast %11 : vector<1x32xi1> to vector<1x32xi1>
    %200 = vector.broadcast %199 : vector<1x32xi1> to vector<16x32xi1>
    %201 = vector.broadcast %cst_80 : f32 to vector<16x32xf32>
    %202 = arith.select %200, %201, %198 : vector<16x32xi1>, vector<16x32xf32>
    %203 = tpu.concatenate %196, %189, %202 in 0 : vector<16x32xf32>, vector<16x32xf32>, vector<16x32xf32> -> vector<48x32xf32>
    %c0_81 = arith.constant 0 : index
    %c0_82 = arith.constant 0 : index
    %204 = vector.load %arg23[%c0_81, %c0_82] : memref<16x48xf32, #tpu.memory_space<vmem>>, vector<16x48xf32>
    %cst_83 = arith.constant dense<0.000000e+00> : vector<16x32xf32>
    %205 = tpu.matmul %204, %203, %cst_83 {dimension_numbers = #tpu.dot_dimension_numbers<[1], [0], [0], [1], [0, 0, 1, 1], [], []>} : vector<16x48xf32>, vector<48x32xf32>, vector<16x32xf32> -> vector<16x32xf32>
    %c0_84 = arith.constant 0 : index
    %c0_85 = arith.constant 0 : index
    %206 = vector.load %arg24[%c0_84, %c0_85] : memref<16x1xf32, #tpu.memory_space<vmem>>, vector<16x1xf32>
    %207 = vector.broadcast %206 : vector<16x1xf32> to vector<16x32xf32>
    %208 = arith.addf %205, %207 : vector<16x32xf32>
    %cst_86 = arith.constant 0.000000e+00 : f32
    %209 = vector.broadcast %cst_86 : f32 to vector<16x32xf32>
    %210 = arith.maximumf %208, %209 : vector<16x32xf32>
    %211 = arith.addf %189, %210 : vector<16x32xf32>
    %cst_87 = arith.constant 0.000000e+00 : f32
    %212 = vector.broadcast %cst_87 : f32 to vector<16x1xf32>
    %213 = vector.extract_strided_slice %211 {offsets = [0, 0], sizes = [16, 31], strides = [1, 1]} : vector<16x32xf32> to vector<16x31xf32>
    %214 = tpu.concatenate %212, %213 in 1 : vector<16x1xf32>, vector<16x31xf32> -> vector<16x32xf32>
    %cst_88 = arith.constant 0.000000e+00 : f32
    %215 = vector.shape_cast %8 : vector<1x32xi1> to vector<1x32xi1>
    %216 = vector.broadcast %215 : vector<1x32xi1> to vector<16x32xi1>
    %217 = vector.broadcast %cst_88 : f32 to vector<16x32xf32>
    %218 = arith.select %216, %217, %214 : vector<16x32xi1>, vector<16x32xf32>
    %219 = vector.extract_strided_slice %211 {offsets = [0, 1], sizes = [16, 31], strides = [1, 1]} : vector<16x32xf32> to vector<16x31xf32>
    %220 = tpu.concatenate %219, %212 in 1 : vector<16x31xf32>, vector<16x1xf32> -> vector<16x32xf32>
    %cst_89 = arith.constant 0.000000e+00 : f32
    %221 = vector.shape_cast %11 : vector<1x32xi1> to vector<1x32xi1>
    %222 = vector.broadcast %221 : vector<1x32xi1> to vector<16x32xi1>
    %223 = vector.broadcast %cst_89 : f32 to vector<16x32xf32>
    %224 = arith.select %222, %223, %220 : vector<16x32xi1>, vector<16x32xf32>
    %225 = tpu.concatenate %218, %211, %224 in 0 : vector<16x32xf32>, vector<16x32xf32>, vector<16x32xf32> -> vector<48x32xf32>
    %c0_90 = arith.constant 0 : index
    %c0_91 = arith.constant 0 : index
    %226 = vector.load %arg21[%c0_90, %c0_91] : memref<16x48xf32, #tpu.memory_space<vmem>>, vector<16x48xf32>
    %cst_92 = arith.constant dense<0.000000e+00> : vector<16x32xf32>
    %227 = tpu.matmul %226, %225, %cst_92 {dimension_numbers = #tpu.dot_dimension_numbers<[1], [0], [0], [1], [0, 0, 1, 1], [], []>} : vector<16x48xf32>, vector<48x32xf32>, vector<16x32xf32> -> vector<16x32xf32>
    %c0_93 = arith.constant 0 : index
    %c0_94 = arith.constant 0 : index
    %228 = vector.load %arg22[%c0_93, %c0_94] : memref<16x1xf32, #tpu.memory_space<vmem>>, vector<16x1xf32>
    %229 = vector.broadcast %228 : vector<16x1xf32> to vector<16x32xf32>
    %230 = arith.addf %227, %229 : vector<16x32xf32>
    %cst_95 = arith.constant 0.000000e+00 : f32
    %231 = vector.broadcast %cst_95 : f32 to vector<16x32xf32>
    %232 = arith.maximumf %230, %231 : vector<16x32xf32>
    %c0_96 = arith.constant 0 : index
    %c0_97 = arith.constant 0 : index
    %233 = vector.load %arg4[%c0_96, %c0_97] : memref<16x32xf32, #tpu.memory_space<vmem>>, vector<16x32xf32>
    %234 = tpu.concatenate %232, %233 in 0 : vector<16x32xf32>, vector<16x32xf32> -> vector<32x32xf32>
    %cst_98 = arith.constant 0.000000e+00 : f32
    %235 = vector.broadcast %cst_98 : f32 to vector<32x1xf32>
    %236 = vector.extract_strided_slice %234 {offsets = [0, 0], sizes = [32, 31], strides = [1, 1]} : vector<32x32xf32> to vector<32x31xf32>
    %237 = tpu.concatenate %235, %236 in 1 : vector<32x1xf32>, vector<32x31xf32> -> vector<32x32xf32>
    %cst_99 = arith.constant 0.000000e+00 : f32
    %238 = vector.shape_cast %8 : vector<1x32xi1> to vector<1x32xi1>
    %239 = vector.broadcast %238 : vector<1x32xi1> to vector<32x32xi1>
    %240 = vector.broadcast %cst_99 : f32 to vector<32x32xf32>
    %241 = arith.select %239, %240, %237 : vector<32x32xi1>, vector<32x32xf32>
    %242 = vector.extract_strided_slice %234 {offsets = [0, 1], sizes = [32, 31], strides = [1, 1]} : vector<32x32xf32> to vector<32x31xf32>
    %243 = tpu.concatenate %242, %235 in 1 : vector<32x31xf32>, vector<32x1xf32> -> vector<32x32xf32>
    %cst_100 = arith.constant 0.000000e+00 : f32
    %244 = vector.shape_cast %11 : vector<1x32xi1> to vector<1x32xi1>
    %245 = vector.broadcast %244 : vector<1x32xi1> to vector<32x32xi1>
    %246 = vector.broadcast %cst_100 : f32 to vector<32x32xf32>
    %247 = arith.select %245, %246, %243 : vector<32x32xi1>, vector<32x32xf32>
    %248 = tpu.concatenate %241, %234, %247 in 0 : vector<32x32xf32>, vector<32x32xf32>, vector<32x32xf32> -> vector<96x32xf32>
    %c0_101 = arith.constant 0 : index
    %c0_102 = arith.constant 0 : index
    %249 = vector.load %arg25[%c0_101, %c0_102] : memref<16x96xf32, #tpu.memory_space<vmem>>, vector<16x96xf32>
    %cst_103 = arith.constant dense<0.000000e+00> : vector<16x32xf32>
    %250 = tpu.matmul %249, %248, %cst_103 {dimension_numbers = #tpu.dot_dimension_numbers<[1], [0], [0], [1], [0, 0, 1, 1], [], []>} : vector<16x96xf32>, vector<96x32xf32>, vector<16x32xf32> -> vector<16x32xf32>
    %c0_104 = arith.constant 0 : index
    %c0_105 = arith.constant 0 : index
    %251 = vector.load %arg26[%c0_104, %c0_105] : memref<16x1xf32, #tpu.memory_space<vmem>>, vector<16x1xf32>
    %252 = vector.broadcast %251 : vector<16x1xf32> to vector<16x32xf32>
    %253 = arith.addf %250, %252 : vector<16x32xf32>
    %cst_106 = arith.constant 0.000000e+00 : f32
    %254 = vector.broadcast %cst_106 : f32 to vector<16x32xf32>
    %255 = arith.maximumf %253, %254 : vector<16x32xf32>
    %256 = tpu.concatenate %0, %255 in 0 : vector<32x32xf32>, vector<16x32xf32> -> vector<48x32xf32>
    %cst_107 = arith.constant 0.000000e+00 : f32
    %257 = vector.broadcast %cst_107 : f32 to vector<48x1xf32>
    %258 = vector.extract_strided_slice %256 {offsets = [0, 0], sizes = [48, 31], strides = [1, 1]} : vector<48x32xf32> to vector<48x31xf32>
    %259 = tpu.concatenate %257, %258 in 1 : vector<48x1xf32>, vector<48x31xf32> -> vector<48x32xf32>
    %cst_108 = arith.constant 0.000000e+00 : f32
    %260 = vector.shape_cast %8 : vector<1x32xi1> to vector<1x32xi1>
    %261 = vector.broadcast %260 : vector<1x32xi1> to vector<48x32xi1>
    %262 = vector.broadcast %cst_108 : f32 to vector<48x32xf32>
    %263 = arith.select %261, %262, %259 : vector<48x32xi1>, vector<48x32xf32>
    %264 = vector.extract_strided_slice %256 {offsets = [0, 1], sizes = [48, 31], strides = [1, 1]} : vector<48x32xf32> to vector<48x31xf32>
    %265 = tpu.concatenate %264, %257 in 1 : vector<48x31xf32>, vector<48x1xf32> -> vector<48x32xf32>
    %cst_109 = arith.constant 0.000000e+00 : f32
    %266 = vector.shape_cast %11 : vector<1x32xi1> to vector<1x32xi1>
    %267 = vector.broadcast %266 : vector<1x32xi1> to vector<48x32xi1>
    %268 = vector.broadcast %cst_109 : f32 to vector<48x32xf32>
    %269 = arith.select %267, %268, %265 : vector<48x32xi1>, vector<48x32xf32>
    %270 = tpu.concatenate %263, %256, %269 in 0 : vector<48x32xf32>, vector<48x32xf32>, vector<48x32xf32> -> vector<144x32xf32>
    %c0_110 = arith.constant 0 : index
    %c0_111 = arith.constant 0 : index
    %271 = vector.load %arg27[%c0_110, %c0_111] : memref<16x144xf32, #tpu.memory_space<vmem>>, vector<16x144xf32>
    %cst_112 = arith.constant dense<0.000000e+00> : vector<16x32xf32>
    %272 = tpu.matmul %271, %270, %cst_112 {dimension_numbers = #tpu.dot_dimension_numbers<[1], [0], [0], [1], [0, 0, 1, 1], [], []>} : vector<16x144xf32>, vector<144x32xf32>, vector<16x32xf32> -> vector<16x32xf32>
    %c0_113 = arith.constant 0 : index
    %c0_114 = arith.constant 0 : index
    %273 = vector.load %arg28[%c0_113, %c0_114] : memref<16x1xf32, #tpu.memory_space<vmem>>, vector<16x1xf32>
    %274 = vector.broadcast %273 : vector<16x1xf32> to vector<16x32xf32>
    %275 = arith.addf %272, %274 : vector<16x32xf32>
    %cst_115 = arith.constant 0.000000e+00 : f32
    %276 = vector.broadcast %cst_115 : f32 to vector<16x32xf32>
    %277 = arith.maximumf %275, %276 : vector<16x32xf32>
    %cst_116 = arith.constant 0.000000e+00 : f32
    %278 = vector.broadcast %cst_116 : f32 to vector<16x1xf32>
    %279 = vector.extract_strided_slice %277 {offsets = [0, 0], sizes = [16, 31], strides = [1, 1]} : vector<16x32xf32> to vector<16x31xf32>
    %280 = tpu.concatenate %278, %279 in 1 : vector<16x1xf32>, vector<16x31xf32> -> vector<16x32xf32>
    %cst_117 = arith.constant 0.000000e+00 : f32
    %281 = vector.shape_cast %8 : vector<1x32xi1> to vector<1x32xi1>
    %282 = vector.broadcast %281 : vector<1x32xi1> to vector<16x32xi1>
    %283 = vector.broadcast %cst_117 : f32 to vector<16x32xf32>
    %284 = arith.select %282, %283, %280 : vector<16x32xi1>, vector<16x32xf32>
    %285 = vector.extract_strided_slice %277 {offsets = [0, 1], sizes = [16, 31], strides = [1, 1]} : vector<16x32xf32> to vector<16x31xf32>
    %286 = tpu.concatenate %285, %278 in 1 : vector<16x31xf32>, vector<16x1xf32> -> vector<16x32xf32>
    %cst_118 = arith.constant 0.000000e+00 : f32
    %287 = vector.shape_cast %11 : vector<1x32xi1> to vector<1x32xi1>
    %288 = vector.broadcast %287 : vector<1x32xi1> to vector<16x32xi1>
    %289 = vector.broadcast %cst_118 : f32 to vector<16x32xf32>
    %290 = arith.select %288, %289, %286 : vector<16x32xi1>, vector<16x32xf32>
    %291 = tpu.concatenate %284, %277, %290 in 0 : vector<16x32xf32>, vector<16x32xf32>, vector<16x32xf32> -> vector<48x32xf32>
    %c0_119 = arith.constant 0 : index
    %c0_120 = arith.constant 0 : index
    %292 = vector.load %arg29[%c0_119, %c0_120] : memref<16x48xf32, #tpu.memory_space<vmem>>, vector<16x48xf32>
    %cst_121 = arith.constant dense<0.000000e+00> : vector<16x32xf32>
    %293 = tpu.matmul %292, %291, %cst_121 {dimension_numbers = #tpu.dot_dimension_numbers<[1], [0], [0], [1], [0, 0, 1, 1], [], []>} : vector<16x48xf32>, vector<48x32xf32>, vector<16x32xf32> -> vector<16x32xf32>
    %c0_122 = arith.constant 0 : index
    %c0_123 = arith.constant 0 : index
    %294 = vector.load %arg30[%c0_122, %c0_123] : memref<16x1xf32, #tpu.memory_space<vmem>>, vector<16x1xf32>
    %295 = vector.broadcast %294 : vector<16x1xf32> to vector<16x32xf32>
    %296 = arith.addf %293, %295 : vector<16x32xf32>
    %297 = arith.addf %255, %296 : vector<16x32xf32>
    %cst_124 = arith.constant 0.000000e+00 : f32
    %298 = vector.broadcast %cst_124 : f32 to vector<16x32xf32>
    %299 = arith.maximumf %297, %298 : vector<16x32xf32>
    %cst_125 = arith.constant 0.000000e+00 : f32
    %300 = vector.broadcast %cst_125 : f32 to vector<16x1xf32>
    %301 = vector.extract_strided_slice %299 {offsets = [0, 0], sizes = [16, 31], strides = [1, 1]} : vector<16x32xf32> to vector<16x31xf32>
    %302 = tpu.concatenate %300, %301 in 1 : vector<16x1xf32>, vector<16x31xf32> -> vector<16x32xf32>
    %cst_126 = arith.constant 0.000000e+00 : f32
    %303 = vector.shape_cast %8 : vector<1x32xi1> to vector<1x32xi1>
    %304 = vector.broadcast %303 : vector<1x32xi1> to vector<16x32xi1>
    %305 = vector.broadcast %cst_126 : f32 to vector<16x32xf32>
    %306 = arith.select %304, %305, %302 : vector<16x32xi1>, vector<16x32xf32>
    %307 = vector.extract_strided_slice %299 {offsets = [0, 1], sizes = [16, 31], strides = [1, 1]} : vector<16x32xf32> to vector<16x31xf32>
    %308 = tpu.concatenate %307, %300 in 1 : vector<16x31xf32>, vector<16x1xf32> -> vector<16x32xf32>
    %cst_127 = arith.constant 0.000000e+00 : f32
    %309 = vector.shape_cast %11 : vector<1x32xi1> to vector<1x32xi1>
    %310 = vector.broadcast %309 : vector<1x32xi1> to vector<16x32xi1>
    %311 = vector.broadcast %cst_127 : f32 to vector<16x32xf32>
    %312 = arith.select %310, %311, %308 : vector<16x32xi1>, vector<16x32xf32>
    %313 = tpu.concatenate %306, %299, %312 in 0 : vector<16x32xf32>, vector<16x32xf32>, vector<16x32xf32> -> vector<48x32xf32>
    %c0_128 = arith.constant 0 : index
    %c0_129 = arith.constant 0 : index
    %314 = vector.load %arg33[%c0_128, %c0_129] : memref<16x48xf32, #tpu.memory_space<vmem>>, vector<16x48xf32>
    %cst_130 = arith.constant dense<0.000000e+00> : vector<16x32xf32>
    %315 = tpu.matmul %314, %313, %cst_130 {dimension_numbers = #tpu.dot_dimension_numbers<[1], [0], [0], [1], [0, 0, 1, 1], [], []>} : vector<16x48xf32>, vector<48x32xf32>, vector<16x32xf32> -> vector<16x32xf32>
    %c0_131 = arith.constant 0 : index
    %c0_132 = arith.constant 0 : index
    %316 = vector.load %arg34[%c0_131, %c0_132] : memref<16x1xf32, #tpu.memory_space<vmem>>, vector<16x1xf32>
    %317 = vector.broadcast %316 : vector<16x1xf32> to vector<16x32xf32>
    %318 = arith.addf %315, %317 : vector<16x32xf32>
    %cst_133 = arith.constant 0.000000e+00 : f32
    %319 = vector.broadcast %cst_133 : f32 to vector<16x32xf32>
    %320 = arith.maximumf %318, %319 : vector<16x32xf32>
    %321 = arith.addf %299, %320 : vector<16x32xf32>
    %cst_134 = arith.constant 0.000000e+00 : f32
    %322 = vector.broadcast %cst_134 : f32 to vector<16x1xf32>
    %323 = vector.extract_strided_slice %321 {offsets = [0, 0], sizes = [16, 31], strides = [1, 1]} : vector<16x32xf32> to vector<16x31xf32>
    %324 = tpu.concatenate %322, %323 in 1 : vector<16x1xf32>, vector<16x31xf32> -> vector<16x32xf32>
    %cst_135 = arith.constant 0.000000e+00 : f32
    %325 = vector.shape_cast %8 : vector<1x32xi1> to vector<1x32xi1>
    %326 = vector.broadcast %325 : vector<1x32xi1> to vector<16x32xi1>
    %327 = vector.broadcast %cst_135 : f32 to vector<16x32xf32>
    %328 = arith.select %326, %327, %324 : vector<16x32xi1>, vector<16x32xf32>
    %329 = vector.extract_strided_slice %321 {offsets = [0, 1], sizes = [16, 31], strides = [1, 1]} : vector<16x32xf32> to vector<16x31xf32>
    %330 = tpu.concatenate %329, %322 in 1 : vector<16x31xf32>, vector<16x1xf32> -> vector<16x32xf32>
    %cst_136 = arith.constant 0.000000e+00 : f32
    %331 = vector.shape_cast %11 : vector<1x32xi1> to vector<1x32xi1>
    %332 = vector.broadcast %331 : vector<1x32xi1> to vector<16x32xi1>
    %333 = vector.broadcast %cst_136 : f32 to vector<16x32xf32>
    %334 = arith.select %332, %333, %330 : vector<16x32xi1>, vector<16x32xf32>
    %335 = tpu.concatenate %328, %321, %334 in 0 : vector<16x32xf32>, vector<16x32xf32>, vector<16x32xf32> -> vector<48x32xf32>
    %c0_137 = arith.constant 0 : index
    %c0_138 = arith.constant 0 : index
    %336 = vector.load %arg31[%c0_137, %c0_138] : memref<16x48xf32, #tpu.memory_space<vmem>>, vector<16x48xf32>
    %cst_139 = arith.constant dense<0.000000e+00> : vector<16x32xf32>
    %337 = tpu.matmul %336, %335, %cst_139 {dimension_numbers = #tpu.dot_dimension_numbers<[1], [0], [0], [1], [0, 0, 1, 1], [], []>} : vector<16x48xf32>, vector<48x32xf32>, vector<16x32xf32> -> vector<16x32xf32>
    %c0_140 = arith.constant 0 : index
    %c0_141 = arith.constant 0 : index
    %338 = vector.load %arg32[%c0_140, %c0_141] : memref<16x1xf32, #tpu.memory_space<vmem>>, vector<16x1xf32>
    %339 = vector.broadcast %338 : vector<16x1xf32> to vector<16x32xf32>
    %340 = arith.addf %337, %339 : vector<16x32xf32>
    %cst_142 = arith.constant 0.000000e+00 : f32
    %341 = vector.broadcast %cst_142 : f32 to vector<16x32xf32>
    %342 = arith.maximumf %340, %341 : vector<16x32xf32>
    %c0_143 = arith.constant 0 : index
    %c0_144 = arith.constant 0 : index
    %343 = vector.load %arg35[%c0_143, %c0_144] : memref<16x32xf32, #tpu.memory_space<vmem>>, vector<16x32xf32>
    tpu.vector_store %arg35[%c0_143, %c0_144], %342 {strides = array<i32>} : memref<16x32xf32, #tpu.memory_space<vmem>>, vector<16x32xf32>,
    return
  }
}

</mosaic_0001>

<llo_original>
// kernel: single_signal_up.1
$region0: #{single_signal_up.1}
  #allocation0 [shape = 'u32[]', space=smem, size = 0x4, offset = 0x4, fixed_abs, tag = 'smem constant byte address 0x4 - core index']
  #allocation1 [shape = 'u32[144,128]{1,0:T(1,128)}', space=vmem, size = 0x12000, scoped, tag = 'internal scratch']
  %s0 = inlined_call_operand.smem [shape: u32[36], index: -1, kind: input, shape index: {}]
  %s1 = sld [smem:[%s0]]
  %s2 = scalar_lea.smem %s0, 1
  %s3 = sld [smem:[%s2]]
  %s4 = scalar_lea.smem %s0, 2
  %s5 = sld [smem:[%s4]]
  %s6 = scalar_lea.smem %s0, 3
  %s7 = sld [smem:[%s6]]
  %s8 = scalar_lea.smem %s0, 4
  %s9 = sld [smem:[%s8]]
  %s10 = scalar_lea.smem %s0, 5
  %s11 = sld [smem:[%s10]]
  %s12 = scalar_lea.smem %s0, 6
  %s13 = sld [smem:[%s12]]
  %s14 = scalar_lea.smem %s0, 7
  %s15 = sld [smem:[%s14]]
  %s16 = scalar_lea.smem %s0, 8
  %s17 = sld [smem:[%s16]]
  %s18 = scalar_lea.smem %s0, 9
  %s19 = sld [smem:[%s18]]
  %s20 = scalar_lea.smem %s0, 10
  %s21 = sld [smem:[%s20]]
  %s22 = scalar_lea.smem %s0, 11
  %s23 = sld [smem:[%s22]]
  %s24 = scalar_lea.smem %s0, 12
  %s25 = sld [smem:[%s24]]
  %s26 = scalar_lea.smem %s0, 13
  %s27 = sld [smem:[%s26]]
  %s28 = scalar_lea.smem %s0, 14
  %s29 = sld [smem:[%s28]]
  %s30 = scalar_lea.smem %s0, 15
  %s31 = sld [smem:[%s30]]
  %s32 = scalar_lea.smem %s0, 16
  %s33 = sld [smem:[%s32]]
  %s34 = scalar_lea.smem %s0, 17
  %s35 = sld [smem:[%s34]]
  %s36 = scalar_lea.smem %s0, 18
  %s37 = sld [smem:[%s36]]
  %s38 = scalar_lea.smem %s0, 19
  %s39 = sld [smem:[%s38]]
  %s40 = scalar_lea.smem %s0, 20
  %s41 = sld [smem:[%s40]]
  %s42 = scalar_lea.smem %s0, 21
  %s43 = sld [smem:[%s42]]
  %s44 = scalar_lea.smem %s0, 22
  %s45 = sld [smem:[%s44]]
  %s46 = scalar_lea.smem %s0, 23
  %s47 = sld [smem:[%s46]]
  %s48 = scalar_lea.smem %s0, 24
  %s49 = sld [smem:[%s48]]
  %s50 = scalar_lea.smem %s0, 25
  %s51 = sld [smem:[%s50]]
  %s52 = scalar_lea.smem %s0, 26
  %s53 = sld [smem:[%s52]]
  %s54 = scalar_lea.smem %s0, 27
  %s55 = sld [smem:[%s54]]
  %s56 = scalar_lea.smem %s0, 28
  %s57 = sld [smem:[%s56]]
  %s58 = scalar_lea.smem %s0, 29
  %s59 = sld [smem:[%s58]]
  %s60 = scalar_lea.smem %s0, 30
  %s61 = sld [smem:[%s60]]
  %s62 = scalar_lea.smem %s0, 31
  %s63 = sld [smem:[%s62]]
  %s64 = scalar_lea.smem %s0, 32
  %s65 = sld [smem:[%s64]]
  %s66 = scalar_lea.smem %s0, 33
  %s67 = sld [smem:[%s66]]
  %s68 = scalar_lea.smem %s0, 34
  %s69 = sld [smem:[%s68]]
  %s70 = scalar_lea.smem %s0, 35
  %s71 = sld [smem:[%s70]]
  %s72 = sld [smem:[#allocation0]]
  $region150: #{single_signal_up.1} parent=0
    _
  %s74 = ssub.s32 1, %s72
  %s75 = scalar_select 0, %s74, %s72
  // Predicated region
  $region2: #{single_signal_up.1} parent=0 // pred_check
    _
  $region3: #{single_signal_up.1} parent=0 // pred_check_branch
    %77 = sbr.rel (0) target = $region5
  $region4: #{single_signal_up.1} parent=0 // pred_region
    _
  $region5: #{single_signal_up.1} parent=0 // pred_fallthru
    _
  // Predicated region
  $region6: #{single_signal_up.1} parent=0 // pred_check
    _
  $region7: #{single_signal_up.1} parent=0 // pred_check_branch
    %79 = sbr.rel (0) target = $region9
  $region8: #{single_signal_up.1} parent=0 // pred_region
    _
  $region9: #{single_signal_up.1} parent=0 // pred_fallthru
    _
  // Predicated region
  $region10: #{single_signal_up.1} parent=0 // pred_check
    _
  $region11: #{single_signal_up.1} parent=0 // pred_check_branch
    %81 = sbr.rel (0) target = $region13
  $region12: #{single_signal_up.1} parent=0 // pred_region
    _
  $region13: #{single_signal_up.1} parent=0 // pred_fallthru
    _
  // Predicated region
  $region14: #{single_signal_up.1} parent=0 // pred_check
    _
  $region15: #{single_signal_up.1} parent=0 // pred_check_branch
    %83 = sbr.rel (0) target = $region17
  $region16: #{single_signal_up.1} parent=0 // pred_region
    _
  $region17: #{single_signal_up.1} parent=0 // pred_fallthru
    _
  // Predicated region
  $region18: #{single_signal_up.1} parent=0 // pred_check
    _
  $region19: #{single_signal_up.1} parent=0 // pred_check_branch
    %85 = sbr.rel (0) target = $region21
  $region20: #{single_signal_up.1} parent=0 // pred_region
    _
  $region21: #{single_signal_up.1} parent=0 // pred_fallthru
    _
  // Predicated region
  $region22: #{single_signal_up.1} parent=0 // pred_check
    _
  $region23: #{single_signal_up.1} parent=0 // pred_check_branch
    %87 = sbr.rel (0) target = $region25
  $region24: #{single_signal_up.1} parent=0 // pred_region
    _
  $region25: #{single_signal_up.1} parent=0 // pred_fallthru
    _
  // Predicated region
  $region26: #{single_signal_up.1} parent=0 // pred_check
    _
  $region27: #{single_signal_up.1} parent=0 // pred_check_branch
    %89 = sbr.rel (0) target = $region29
  $region28: #{single_signal_up.1} parent=0 // pred_region
    _
  $region29: #{single_signal_up.1} parent=0 // pred_fallthru
    _
  // Predicated region
  $region30: #{single_signal_up.1} parent=0 // pred_check
    _
  $region31: #{single_signal_up.1} parent=0 // pred_check_branch
    %91 = sbr.rel (0) target = $region33
  $region32: #{single_signal_up.1} parent=0 // pred_region
    _
  $region33: #{single_signal_up.1} parent=0 // pred_fallthru
    _
  // Predicated region
  $region34: #{single_signal_up.1} parent=0 // pred_check
    _
  $region35: #{single_signal_up.1} parent=0 // pred_check_branch
    %93 = sbr.rel (0) target = $region37
  $region36: #{single_signal_up.1} parent=0 // pred_region
    _
  $region37: #{single_signal_up.1} parent=0 // pred_fallthru
    _
  // Predicated region
  $region38: #{single_signal_up.1} parent=0 // pred_check
    _
  $region39: #{single_signal_up.1} parent=0 // pred_check_branch
    %95 = sbr.rel (0) target = $region41
  $region40: #{single_signal_up.1} parent=0 // pred_region
    _
  $region41: #{single_signal_up.1} parent=0 // pred_fallthru
    _
  // Predicated region
  $region42: #{single_signal_up.1} parent=0 // pred_check
    _
  $region43: #{single_signal_up.1} parent=0 // pred_check_branch
    %97 = sbr.rel (0) target = $region45
  $region44: #{single_signal_up.1} parent=0 // pred_region
    _
  $region45: #{single_signal_up.1} parent=0 // pred_fallthru
    _
  // Predicated region
  $region46: #{single_signal_up.1} parent=0 // pred_check
    _
  $region47: #{single_signal_up.1} parent=0 // pred_check_branch
    %99 = sbr.rel (0) target = $region49
  $region48: #{single_signal_up.1} parent=0 // pred_region
    _
  $region49: #{single_signal_up.1} parent=0 // pred_fallthru
    _
  // Predicated region
  $region50: #{single_signal_up.1} parent=0 // pred_check
    _
  $region51: #{single_signal_up.1} parent=0 // pred_check_branch
    %101 = sbr.rel (0) target = $region53
  $region52: #{single_signal_up.1} parent=0 // pred_region
    _
  $region53: #{single_signal_up.1} parent=0 // pred_fallthru
    _
  // Predicated region
  $region54: #{single_signal_up.1} parent=0 // pred_check
    _
  $region55: #{single_signal_up.1} parent=0 // pred_check_branch
    %103 = sbr.rel (0) target = $region57
  $region56: #{single_signal_up.1} parent=0 // pred_region
    _
  $region57: #{single_signal_up.1} parent=0 // pred_fallthru
    _
  // Predicated region
  $region58: #{single_signal_up.1} parent=0 // pred_check
    _
  $region59: #{single_signal_up.1} parent=0 // pred_check_branch
    %105 = sbr.rel (0) target = $region61
  $region60: #{single_signal_up.1} parent=0 // pred_region
    _
  $region61: #{single_signal_up.1} parent=0 // pred_fallthru
    _
  // Predicated region
  $region62: #{single_signal_up.1} parent=0 // pred_check
    _
  $region63: #{single_signal_up.1} parent=0 // pred_check_branch
    %107 = sbr.rel (0) target = $region65
  $region64: #{single_signal_up.1} parent=0 // pred_region
    _
  $region65: #{single_signal_up.1} parent=0 // pred_fallthru
    _
  // Predicated region
  $region66: #{single_signal_up.1} parent=0 // pred_check
    _
  $region67: #{single_signal_up.1} parent=0 // pred_check_branch
    %109 = sbr.rel (0) target = $region69
  $region68: #{single_signal_up.1} parent=0 // pred_region
    _
  $region69: #{single_signal_up.1} parent=0 // pred_fallthru
    _
  // Predicated region
  $region70: #{single_signal_up.1} parent=0 // pred_check
    _
  $region71: #{single_signal_up.1} parent=0 // pred_check_branch
    %111 = sbr.rel (0) target = $region73
  $region72: #{single_signal_up.1} parent=0 // pred_region
    _
  $region73: #{single_signal_up.1} parent=0 // pred_fallthru
    _
  // Predicated region
  $region74: #{single_signal_up.1} parent=0 // pred_check
    _
  $region75: #{single_signal_up.1} parent=0 // pred_check_branch
    %113 = sbr.rel (0) target = $region77
  $region76: #{single_signal_up.1} parent=0 // pred_region
    _
  $region77: #{single_signal_up.1} parent=0 // pred_fallthru
    _
  // Predicated region
  $region78: #{single_signal_up.1} parent=0 // pred_check
    _
  $region79: #{single_signal_up.1} parent=0 // pred_check_branch
    %115 = sbr.rel (0) target = $region81
  $region80: #{single_signal_up.1} parent=0 // pred_region
    _
  $region81: #{single_signal_up.1} parent=0 // pred_fallthru
    _
  // Predicated region
  $region82: #{single_signal_up.1} parent=0 // pred_check
    _
  $region83: #{single_signal_up.1} parent=0 // pred_check_branch
    %117 = sbr.rel (0) target = $region85
  $region84: #{single_signal_up.1} parent=0 // pred_region
    _
  $region85: #{single_signal_up.1} parent=0 // pred_fallthru
    _
  // Predicated region
  $region86: #{single_signal_up.1} parent=0 // pred_check
    _
  $region87: #{single_signal_up.1} parent=0 // pred_check_branch
    %119 = sbr.rel (0) target = $region89
  $region88: #{single_signal_up.1} parent=0 // pred_region
    _
  $region89: #{single_signal_up.1} parent=0 // pred_fallthru
    _
  // Predicated region
  $region90: #{single_signal_up.1} parent=0 // pred_check
    _
  $region91: #{single_signal_up.1} parent=0 // pred_check_branch
    %121 = sbr.rel (0) target = $region93
  $region92: #{single_signal_up.1} parent=0 // pred_region
    _
  $region93: #{single_signal_up.1} parent=0 // pred_fallthru
    _
  // Predicated region
  $region94: #{single_signal_up.1} parent=0 // pred_check
    _
  $region95: #{single_signal_up.1} parent=0 // pred_check_branch
    %123 = sbr.rel (0) target = $region97
  $region96: #{single_signal_up.1} parent=0 // pred_region
    _
  $region97: #{single_signal_up.1} parent=0 // pred_fallthru
    _
  // Predicated region
  $region98: #{single_signal_up.1} parent=0 // pred_check
    _
  $region99: #{single_signal_up.1} parent=0 // pred_check_branch
    %125 = sbr.rel (0) target = $region101
  $region100: #{single_signal_up.1} parent=0 // pred_region
    _
  $region101: #{single_signal_up.1} parent=0 // pred_fallthru
    _
  // Predicated region
  $region102: #{single_signal_up.1} parent=0 // pred_check
    _
  $region103: #{single_signal_up.1} parent=0 // pred_check_branch
    %127 = sbr.rel (0) target = $region105
  $region104: #{single_signal_up.1} parent=0 // pred_region
    _
  $region105: #{single_signal_up.1} parent=0 // pred_fallthru
    _
  // Predicated region
  $region106: #{single_signal_up.1} parent=0 // pred_check
    _
  $region107: #{single_signal_up.1} parent=0 // pred_check_branch
    %129 = sbr.rel (0) target = $region109
  $region108: #{single_signal_up.1} parent=0 // pred_region
    _
  $region109: #{single_signal_up.1} parent=0 // pred_fallthru
    _
  // Predicated region
  $region110: #{single_signal_up.1} parent=0 // pred_check
    _
  $region111: #{single_signal_up.1} parent=0 // pred_check_branch
    %131 = sbr.rel (0) target = $region113
  $region112: #{single_signal_up.1} parent=0 // pred_region
    _
  $region113: #{single_signal_up.1} parent=0 // pred_fallthru
    _
  // Predicated region
  $region114: #{single_signal_up.1} parent=0 // pred_check
    _
  $region115: #{single_signal_up.1} parent=0 // pred_check_branch
    %133 = sbr.rel (0) target = $region117
  $region116: #{single_signal_up.1} parent=0 // pred_region
    _
  $region117: #{single_signal_up.1} parent=0 // pred_fallthru
    _
  // Predicated region
  $region118: #{single_signal_up.1} parent=0 // pred_check
    _
  $region119: #{single_signal_up.1} parent=0 // pred_check_branch
    %135 = sbr.rel (0) target = $region121
  $region120: #{single_signal_up.1} parent=0 // pred_region
    _
  $region121: #{single_signal_up.1} parent=0 // pred_fallthru
    _
  // Predicated region
  $region122: #{single_signal_up.1} parent=0 // pred_check
    _
  $region123: #{single_signal_up.1} parent=0 // pred_check_branch
    %137 = sbr.rel (0) target = $region125
  $region124: #{single_signal_up.1} parent=0 // pred_region
    _
  $region125: #{single_signal_up.1} parent=0 // pred_fallthru
    _
  // Predicated region
  $region126: #{single_signal_up.1} parent=0 // pred_check
    _
  $region127: #{single_signal_up.1} parent=0 // pred_check_branch
    %139 = sbr.rel (0) target = $region129
  $region128: #{single_signal_up.1} parent=0 // pred_region
    _
  $region129: #{single_signal_up.1} parent=0 // pred_fallthru
    _
  // Predicated region
  $region130: #{single_signal_up.1} parent=0 // pred_check
    _
  $region131: #{single_signal_up.1} parent=0 // pred_check_branch
    %141 = sbr.rel (0) target = $region133
  $region132: #{single_signal_up.1} parent=0 // pred_region
    _
  $region133: #{single_signal_up.1} parent=0 // pred_fallthru
    _
  // Predicated region
  $region134: #{single_signal_up.1} parent=0 // pred_check
    _
  $region135: #{single_signal_up.1} parent=0 // pred_check_branch
    %143 = sbr.rel (0) target = $region137
  $region136: #{single_signal_up.1} parent=0 // pred_region
    _
  $region137: #{single_signal_up.1} parent=0 // pred_fallthru
    _
  // Predicated region
  $region138: #{single_signal_up.1} parent=0 // pred_check
    _
  $region139: #{single_signal_up.1} parent=0 // pred_check_branch
    %145 = sbr.rel (0) target = $region141
  $region140: #{single_signal_up.1} parent=0 // pred_region
    _
  $region141: #{single_signal_up.1} parent=0 // pred_fallthru
    _
  %v146 = vld [vmem:[%s1] sm:$0xff]
  %v147 = vld [vmem:[%s1 + $0x8] sm:$0xff]
  %v148 = vld [vmem:[%s1 + $0x10] sm:$0xff]
  %v149 = vld [vmem:[%s1 + $0x18] sm:$0xff]
  %v150 = vlaneseq
  %v151 = vand.u32 %v150, 127
  %vm152 = vcmp.eq.s32.totalorder %v151, 0
  %vm153 = vcmp.eq.s32.totalorder %v151, 15
  %vm154 = vcmp.eq.s32.totalorder %v151, 16
  %vm155 = vmor %vm152, %vm154
  %vm156 = vcmp.eq.s32.totalorder %v151, 31
  %vm157 = vmor %vm153, %vm156
  %v158 = vld [vmem:[%s3] sm:$0xff]
  %v159 = vld [vmem:[%s3 + $0x8] sm:$0xff]
  %v160 = vld [vmem:[%s3 + $0x10] sm:$0xff]
  %v161 = vld [vmem:[%s3 + $0x18] sm:$0xff]
  %v162 = vld [vmem:[%s5] sm:$0xff]
  %v163 = vld [vmem:[%s5 + $0x8] sm:$0xff]
  %170 = vrot.lane.b32.xlu0 %v158, 1
  %v171 = vpop.permute.xlu0 %170
  %172 = vrot.lane.b32.xlu0 %v159, 1
  %v173 = vpop.permute.xlu0 %172
  %174 = vrot.lane.b32.xlu0 %v160, 1
  %v175 = vpop.permute.xlu0 %174
  %176 = vrot.lane.b32.xlu0 %v161, 1
  %v177 = vpop.permute.xlu0 %176
  %178 = vrot.lane.b32.xlu0 %v162, 1
  %v179 = vpop.permute.xlu0 %178
  %180 = vrot.lane.b32.xlu0 %v163, 1
  %v181 = vpop.permute.xlu0 %180
  %vm188 = vcmask 7168
  %v189 = vsel %vm188, 0.0, %v171
  %v190 = vsel %vm188, 0.0, %v173
  %v191 = vsel %vm188, 0.0, %v175
  %v192 = vsel %vm188, 0.0, %v177
  %v193 = vsel %vm188, 0.0, %v179
  %v194 = vsel %vm188, 0.0, %v181
  %v195 = vsel %vm155, 1, 0
  %vm196 = vcmp.eq.s32.totalorder %v195, 1
  %v197 = vsel %vm196, 0.0, %v189
  %v198 = vsel %vm196, 0.0, %v190
  %v199 = vsel %vm196, 0.0, %v191
  %v200 = vsel %vm196, 0.0, %v192
  %v201 = vsel %vm196, 0.0, %v193
  %v202 = vsel %vm196, 0.0, %v194
  %203 = vrot.lane.b32.xlu0 %v158, 127
  %v204 = vpop.permute.xlu0 %203
  %205 = vrot.lane.b32.xlu0 %v159, 127
  %v206 = vpop.permute.xlu0 %205
  %207 = vrot.lane.b32.xlu0 %v160, 127
  %v208 = vpop.permute.xlu0 %207
  %209 = vrot.lane.b32.xlu0 %v161, 127
  %v210 = vpop.permute.xlu0 %209
  %211 = vrot.lane.b32.xlu0 %v162, 127
  %v212 = vpop.permute.xlu0 %211
  %213 = vrot.lane.b32.xlu0 %v163, 127
  %v214 = vpop.permute.xlu0 %213
  %vm221 = vcmask 252928
  %v222 = vsel %vm221, %v204, 0.0
  %v223 = vsel %vm221, %v206, 0.0
  %v224 = vsel %vm221, %v208, 0.0
  %v225 = vsel %vm221, %v210, 0.0
  %v226 = vsel %vm221, %v212, 0.0
  %v227 = vsel %vm221, %v214, 0.0
  %v228 = vsel %vm157, 1, 0
  %vm229 = vcmp.eq.s32.totalorder %v228, 1
  %v230 = vsel %vm229, 0.0, %v222
  %v231 = vsel %vm229, 0.0, %v223
  %v232 = vsel %vm229, 0.0, %v224
  %v233 = vsel %vm229, 0.0, %v225
  %v234 = vsel %vm229, 0.0, %v226
  %v235 = vsel %vm229, 0.0, %v227
  %v236 = vld [vmem:[%s11] sm:$0xff]
  %v237 = vld [vmem:[%s11 + $0x8] sm:$0xff]
  %v238 = vld [vmem:[%s11 + $0x10] sm:$0xff]
  %v239 = vld [vmem:[%s11 + $0x18] sm:$0xff]
  %v240 = vld [vmem:[%s13] sm:$0xff]
  %v241 = vld [vmem:[%s13 + $0x8] sm:$0xff]
  %243 = vset.pattern.permute.xlu0 0
  %244 = vperm.xlu0 %243, %v240
  %v245 = vpop.permute.xlu0 %244
  %248 = vset.pattern.permute.xlu0 0
  %249 = vperm.xlu0 %248, %v241
  %v250 = vpop.permute.xlu0 %249
  %vm252 = vcmask 130048
  %v254 = vsel %vm252, %v237, 0
  %v257 = vsel %vm252, %v239, 0
  %259 = vmatprep.subr.mxu0 0.0
  %260 = vmatpush1.msra.mxu0 %v197
  %261 = vmatprep.subr.mxu0 0.0
  %262 = vmatpush1.msra.mxu0 %v198
  %263 = vmatprep.subr.mxu0 0.0
  %264 = vmatpush1.msra.mxu0 %v199
  %265 = vmatprep.subr.mxu0 0.0
  %266 = vmatpush1.msra.mxu0 %v200
  %267 = vmatprep.subr.mxu0 0.0
  %268 = vmatpush1.msra.mxu0 %v201
  %269 = vmatprep.subr.mxu0 0.0
  %270 = vmatpush1.msra.mxu0 %v202
  %271 = vmatprep.subr.mxu0 0.0
  %272 = vmatpush1.msra.mxu0 %v158
  %273 = vmatprep.subr.mxu0 0.0
  %274 = vmatpush1.msra.mxu0 %v159
  %275 = vmatprep.subr.mxu0 0.0
  %276 = vmatpush1.msra.mxu0 %v160
  %277 = vmatprep.subr.mxu0 0.0
  %278 = vmatpush1.msra.mxu0 %v161
  %279 = vmatprep.subr.mxu0 0.0
  %280 = vmatpush1.msra.mxu0 %v162
  %281 = vmatprep.subr.mxu0 0.0
  %282 = vmatpush1.msra.mxu0 %v163
  %283 = vmatprep.subr.mxu0 0.0
  %284 = vmatpush1.msra.mxu0 %v230
  %285 = vmatprep.subr.mxu0 0.0
  %286 = vmatpush1.msra.mxu0 %v231
  %287 = vmatprep.subr.mxu0 0.0
  %288 = vmatpush1.msra.mxu0 %v232
  %289 = vmatprep.subr.mxu0 0.0
  %290 = vmatpush1.msra.mxu0 %v233
  %291 = vmatprep.subr.mxu0 0.0
  %292 = vmatpush1.msra.mxu0 %v234
  %293 = vmatprep.subr.mxu0 0.0
  %294 = vmatpush1.msra.mxu0 %v235
  %295 = vmatprep.subr.mxu0 0.0
  %296 = vmatpush1.msra.mxu0 0.0
  %297 = vmatprep.subr.mxu0 0.0
  %298 = vmatpush1.msra.mxu0 0.0
  %299 = vmatprep.subr.mxu0 0.0
  %300 = vmatpush1.msra.mxu0 0.0
  %301 = vmatprep.subr.mxu0 0.0
  %302 = vmatpush1.msra.mxu0 0.0
  %303 = vmatprep.subr.mxu0 0.0
  %304 = vmatpush1.msra.mxu0 0.0
  %305 = vmatprep.subr.mxu0 0.0
  %306 = vmatpush1.msra.mxu0 0.0
  %307 = vmatprep.subr.mxu0 0.0
  %308 = vmatpush1.msra.mxu0 0.0
  %309 = vmatprep.subr.mxu0 0.0
  %310 = vmatpush1.msra.mxu0 0.0
  %311 = vmatprep.subr.mxu0 0.0
  %312 = vmatpush1.msra.mxu0 0.0
  %313 = vmatprep.subr.mxu0 0.0
  %314 = vmatpush1.msra.mxu0 0.0
  %315 = vmatprep.subr.mxu0 0.0
  %316 = vmatpush1.msra.mxu0 0.0
  %317 = vmatprep.subr.mxu0 0.0
  %318 = vmatpush1.msra.mxu0 0.0
  %319 = vmatprep.subr.mxu0 0.0
  %320 = vmatpush1.msra.mxu0 0.0
  %321 = vmatprep.subr.mxu0 0.0
  %322 = vmatpush1.msra.mxu0 0.0
  %323 = vmatprep.mubr.f32.mxu0 %v254
  %324 = vmatmul.mubr.f32.gmra.mrb[0].mxu0 %v236
  %v325 = vpop.f32.mrb[0].mxu0
  %v326 = vadd.f32 %v245, %v325
  %v327 = vpop.f32.mrb[0].mxu0
  %328 = vmatprep.mubr.f32.mxu0 %v257
  %329 = vmatmul.mubr.f32.gmra.mrb[0].mxu0 %v238
  %v330 = vpop.f32.mrb[0].mxu0
  %v331 = vadd.f32 %v250, %v330
  %v332 = vpop.f32.mrb[0].mxu0
  %333 = vdwg.mxu0
  %v334 = vmax.f32 %v326, 0.0
  %v335 = vmax.f32 %v331, 0.0
  %342 = vrot.lane.b32.xlu0 %v146, 1
  %v343 = vpop.permute.xlu0 %342
  %344 = vrot.lane.b32.xlu0 %v147, 1
  %v345 = vpop.permute.xlu0 %344
  %346 = vrot.lane.b32.xlu0 %v148, 1
  %v347 = vpop.permute.xlu0 %346
  %348 = vrot.lane.b32.xlu0 %v149, 1
  %v349 = vpop.permute.xlu0 %348
  %350 = vrot.lane.b32.xlu0 %v334, 1
  %v351 = vpop.permute.xlu0 %350
  %352 = vrot.lane.b32.xlu0 %v335, 1
  %v353 = vpop.permute.xlu0 %352
  %v360 = vsel %vm188, 0.0, %v343
  %v361 = vsel %vm188, 0.0, %v345
  %v362 = vsel %vm188, 0.0, %v347
  %v363 = vsel %vm188, 0.0, %v349
  %v364 = vsel %vm188, 0.0, %v351
  %v365 = vsel %vm188, 0.0, %v353
  %v366 = vsel %vm196, 0.0, %v360
  %v367 = vsel %vm196, 0.0, %v361
  %v368 = vsel %vm196, 0.0, %v362
  %v369 = vsel %vm196, 0.0, %v363
  %v370 = vsel %vm196, 0.0, %v364
  %v371 = vsel %vm196, 0.0, %v365
  %372 = vrot.lane.b32.xlu0 %v146, 127
  %v373 = vpop.permute.xlu0 %372
  %374 = vrot.lane.b32.xlu0 %v147, 127
  %v375 = vpop.permute.xlu0 %374
  %376 = vrot.lane.b32.xlu0 %v148, 127
  %v377 = vpop.permute.xlu0 %376
  %378 = vrot.lane.b32.xlu0 %v149, 127
  %v379 = vpop.permute.xlu0 %378
  %380 = vrot.lane.b32.xlu0 %v334, 127
  %v381 = vpop.permute.xlu0 %380
  %382 = vrot.lane.b32.xlu0 %v335, 127
  %v383 = vpop.permute.xlu0 %382
  %v390 = vsel %vm221, %v373, 0.0
  %v391 = vsel %vm221, %v375, 0.0
  %v392 = vsel %vm221, %v377, 0.0
  %v393 = vsel %vm221, %v379, 0.0
  %v394 = vsel %vm221, %v381, 0.0
  %v395 = vsel %vm221, %v383, 0.0
  %v396 = vsel %vm229, 0.0, %v390
  %v397 = vsel %vm229, 0.0, %v391
  %v398 = vsel %vm229, 0.0, %v392
  %v399 = vsel %vm229, 0.0, %v393
  %v400 = vsel %vm229, 0.0, %v394
  %v401 = vsel %vm229, 0.0, %v395
  %v402 = vld [vmem:[%s15] sm:$0xff]
  %v403 = vld [vmem:[%s15 + $0x8] sm:$0xff]
  %v404 = vld [vmem:[%s15 + $0x10] sm:$0xff]
  %v405 = vld [vmem:[%s15 + $0x18] sm:$0xff]
  %v406 = vld [vmem:[%s17] sm:$0xff]
  %v407 = vld [vmem:[%s17 + $0x8] sm:$0xff]
  %409 = vset.pattern.permute.xlu0 0
  %410 = vperm.xlu0 %409, %v406
  %v411 = vpop.permute.xlu0 %410
  %414 = vset.pattern.permute.xlu0 0
  %415 = vperm.xlu0 %414, %v407
  %v416 = vpop.permute.xlu0 %415
  %v419 = vsel %vm252, %v403, 0
  %v422 = vsel %vm252, %v405, 0
  %424 = vmatprep.subr.mxu0 0.0
  %425 = vmatpush1.msra.mxu0 %v366
  %426 = vmatprep.subr.mxu0 0.0
  %427 = vmatpush1.msra.mxu0 %v367
  %428 = vmatprep.subr.mxu0 0.0
  %429 = vmatpush1.msra.mxu0 %v368
  %430 = vmatprep.subr.mxu0 0.0
  %431 = vmatpush1.msra.mxu0 %v369
  %432 = vmatprep.subr.mxu0 0.0
  %433 = vmatpush1.msra.mxu0 %v370
  %434 = vmatprep.subr.mxu0 0.0
  %435 = vmatpush1.msra.mxu0 %v371
  %436 = vmatprep.subr.mxu0 0.0
  %437 = vmatpush1.msra.mxu0 %v146
  %438 = vmatprep.subr.mxu0 0.0
  %439 = vmatpush1.msra.mxu0 %v147
  %440 = vmatprep.subr.mxu0 0.0
  %441 = vmatpush1.msra.mxu0 %v148
  %442 = vmatprep.subr.mxu0 0.0
  %443 = vmatpush1.msra.mxu0 %v149
  %444 = vmatprep.subr.mxu0 0.0
  %445 = vmatpush1.msra.mxu0 %v334
  %446 = vmatprep.subr.mxu0 0.0
  %447 = vmatpush1.msra.mxu0 %v335
  %448 = vmatprep.subr.mxu0 0.0
  %449 = vmatpush1.msra.mxu0 %v396
  %450 = vmatprep.subr.mxu0 0.0
  %451 = vmatpush1.msra.mxu0 %v397
  %452 = vmatprep.subr.mxu0 0.0
  %453 = vmatpush1.msra.mxu0 %v398
  %454 = vmatprep.subr.mxu0 0.0
  %455 = vmatpush1.msra.mxu0 %v399
  %456 = vmatprep.subr.mxu0 0.0
  %457 = vmatpush1.msra.mxu0 %v400
  %458 = vmatprep.subr.mxu0 0.0
  %459 = vmatpush1.msra.mxu0 %v401
  %460 = vmatprep.subr.mxu0 0.0
  %461 = vmatpush1.msra.mxu0 0.0
  %462 = vmatprep.subr.mxu0 0.0
  %463 = vmatpush1.msra.mxu0 0.0
  %464 = vmatprep.subr.mxu0 0.0
  %465 = vmatpush1.msra.mxu0 0.0
  %466 = vmatprep.subr.mxu0 0.0
  %467 = vmatpush1.msra.mxu0 0.0
  %468 = vmatprep.subr.mxu0 0.0
  %469 = vmatpush1.msra.mxu0 0.0
  %470 = vmatprep.subr.mxu0 0.0
  %471 = vmatpush1.msra.mxu0 0.0
  %472 = vmatprep.subr.mxu0 0.0
  %473 = vmatpush1.msra.mxu0 0.0
  %474 = vmatprep.subr.mxu0 0.0
  %475 = vmatpush1.msra.mxu0 0.0
  %476 = vmatprep.subr.mxu0 0.0
  %477 = vmatpush1.msra.mxu0 0.0
  %478 = vmatprep.subr.mxu0 0.0
  %479 = vmatpush1.msra.mxu0 0.0
  %480 = vmatprep.subr.mxu0 0.0
  %481 = vmatpush1.msra.mxu0 0.0
  %482 = vmatprep.subr.mxu0 0.0
  %483 = vmatpush1.msra.mxu0 0.0
  %484 = vmatprep.subr.mxu0 0.0
  %485 = vmatpush1.msra.mxu0 0.0
  %486 = vmatprep.subr.mxu0 0.0
  %487 = vmatpush1.msra.mxu0 0.0
  %488 = vmatprep.mubr.f32.mxu0 %v419
  %489 = vmatmul.mubr.f32.gmra.mrb[0].mxu0 %v402
  %v490 = vpop.f32.mrb[0].mxu0
  %v491 = vadd.f32 %v411, %v490
  %v492 = vpop.f32.mrb[0].mxu0
  %493 = vmatprep.mubr.f32.mxu0 %v422
  %494 = vmatmul.mubr.f32.gmra.mrb[0].mxu0 %v404
  %v495 = vpop.f32.mrb[0].mxu0
  %v496 = vadd.f32 %v416, %v495
  %v497 = vpop.f32.mrb[0].mxu0
  %498 = vdwg.mxu0
  %v499 = vmax.f32 %v491, 0.0
  %v500 = vmax.f32 %v496, 0.0
  %503 = vrot.lane.b32.xlu0 %v499, 1
  %v504 = vpop.permute.xlu0 %503
  %505 = vrot.lane.b32.xlu0 %v500, 1
  %v506 = vpop.permute.xlu0 %505
  %v509 = vsel %vm188, 0.0, %v504
  %v510 = vsel %vm188, 0.0, %v506
  %v511 = vsel %vm196, 0.0, %v509
  %v512 = vsel %vm196, 0.0, %v510
  %513 = vrot.lane.b32.xlu0 %v499, 127
  %v514 = vpop.permute.xlu0 %513
  %515 = vrot.lane.b32.xlu0 %v500, 127
  %v516 = vpop.permute.xlu0 %515
  %v519 = vsel %vm221, %v514, 0.0
  %v520 = vsel %vm221, %v516, 0.0
  %v521 = vsel %vm229, 0.0, %v519
  %v522 = vsel %vm229, 0.0, %v520
  %v523 = vld [vmem:[%s19] sm:$0xff]
  %v524 = vld [vmem:[%s19 + $0x8] sm:$0xff]
  %v525 = vld [vmem:[%s21] sm:$0xff]
  %v526 = vld [vmem:[%s21 + $0x8] sm:$0xff]
  %528 = vset.pattern.permute.xlu0 0
  %529 = vperm.xlu0 %528, %v525
  %v530 = vpop.permute.xlu0 %529
  %533 = vset.pattern.permute.xlu0 0
  %534 = vperm.xlu0 %533, %v526
  %v535 = vpop.permute.xlu0 %534
  %vm537 = vcmask 392192
  %v539 = vsel %vm537, %v523, 0
  %v542 = vsel %vm537, %v524, 0
  %544 = vmatprep.subr.mxu0 0.0
  %545 = vmatpush1.msra.mxu0 %v511
  %546 = vmatprep.subr.mxu0 0.0
  %547 = vmatpush1.msra.mxu0 %v512
  %548 = vmatprep.subr.mxu0 0.0
  %549 = vmatpush1.msra.mxu0 %v499
  %550 = vmatprep.subr.mxu0 0.0
  %551 = vmatpush1.msra.mxu0 %v500
  %552 = vmatprep.subr.mxu0 0.0
  %553 = vmatpush1.msra.mxu0 %v521
  %554 = vmatprep.subr.mxu0 0.0
  %555 = vmatpush1.msra.mxu0 %v522
  %556 = vmatprep.subr.mxu0 0.0
  %557 = vmatpush1.msra.mxu0 0.0
  %558 = vmatprep.subr.mxu0 0.0
  %559 = vmatpush1.msra.mxu0 0.0
  %560 = vmatprep.subr.mxu0 0.0
  %561 = vmatpush1.msra.mxu0 0.0
  %562 = vmatprep.subr.mxu0 0.0
  %563 = vmatpush1.msra.mxu0 0.0
  %564 = vmatprep.subr.mxu0 0.0
  %565 = vmatpush1.msra.mxu0 0.0
  %566 = vmatprep.subr.mxu0 0.0
  %567 = vmatpush1.msra.mxu0 0.0
  %568 = vmatprep.subr.mxu0 0.0
  %569 = vmatpush1.msra.mxu0 0.0
  %570 = vmatprep.subr.mxu0 0.0
  %571 = vmatpush1.msra.mxu0 0.0
  %572 = vmatprep.subr.mxu0 0.0
  %573 = vmatpush1.msra.mxu0 0.0
  %574 = vmatprep.subr.mxu0 0.0
  %575 = vmatpush1.msra.mxu0 0.0
  %576 = vmatprep.subr.mxu0 0.0
  %577 = vmatpush1.msra.mxu0 0.0
  %578 = vmatprep.subr.mxu0 0.0
  %579 = vmatpush1.msra.mxu0 0.0
  %580 = vmatprep.subr.mxu0 0.0
  %581 = vmatpush1.msra.mxu0 0.0
  %582 = vmatprep.subr.mxu0 0.0
  %583 = vmatpush1.msra.mxu0 0.0
  %584 = vmatprep.subr.mxu0 0.0
  %585 = vmatpush1.msra.mxu0 0.0
  %586 = vmatprep.subr.mxu0 0.0
  %587 = vmatpush1.msra.mxu0 0.0
  %588 = vmatprep.subr.mxu0 0.0
  %589 = vmatpush1.msra.mxu0 0.0
  %590 = vmatprep.subr.mxu0 0.0
  %591 = vmatpush1.msra.mxu0 0.0
  %592 = vmatprep.subr.mxu0 0.0
  %593 = vmatpush1.msra.mxu0 0.0
  %594 = vmatprep.subr.mxu0 0.0
  %595 = vmatpush1.msra.mxu0 0.0
  %596 = vmatprep.subr.mxu0 0.0
  %597 = vmatpush1.msra.mxu0 0.0
  %598 = vmatprep.subr.mxu0 0.0
  %599 = vmatpush1.msra.mxu0 0.0
  %600 = vmatprep.subr.mxu0 0.0
  %601 = vmatpush1.msra.mxu0 0.0
  %602 = vmatprep.subr.mxu0 0.0
  %603 = vmatpush1.msra.mxu0 0.0
  %604 = vmatprep.subr.mxu0 0.0
  %605 = vmatpush1.msra.mxu0 0.0
  %606 = vmatprep.subr.mxu0 0.0
  %607 = vmatpush1.msra.mxu0 0.0
  %608 = vmatprep.mubr.f32.mxu0 0.0
  %609 = vmatmul.mubr.f32.gmra.mrb[0].mxu0 %v539
  %v610 = vpop.f32.mrb[0].mxu0
  %v611 = vadd.f32 %v530, %v610
  %v612 = vpop.f32.mrb[0].mxu0
  %613 = vmatprep.mubr.f32.mxu0 0.0
  %614 = vmatmul.mubr.f32.gmra.mrb[0].mxu0 %v542
  %v615 = vpop.f32.mrb[0].mxu0
  %v616 = vadd.f32 %v535, %v615
  %v617 = vpop.f32.mrb[0].mxu0
  %618 = vdwg.mxu0
  %v619 = vadd.f32 %v334, %v611
  %v620 = vadd.f32 %v335, %v616
  %v621 = vmax.f32 %v619, 0.0
  %v622 = vmax.f32 %v620, 0.0
  %625 = vrot.lane.b32.xlu0 %v621, 1
  %v626 = vpop.permute.xlu0 %625
  %627 = vrot.lane.b32.xlu0 %v622, 1
  %v628 = vpop.permute.xlu0 %627
  %v631 = vsel %vm188, 0.0, %v626
  %v632 = vsel %vm188, 0.0, %v628
  %v633 = vsel %vm196, 0.0, %v631
  %v634 = vsel %vm196, 0.0, %v632
  %635 = vrot.lane.b32.xlu0 %v621, 127
  %v636 = vpop.permute.xlu0 %635
  %637 = vrot.lane.b32.xlu0 %v622, 127
  %v638 = vpop.permute.xlu0 %637
  %v641 = vsel %vm221, %v636, 0.0
  %v642 = vsel %vm221, %v638, 0.0
  %v643 = vsel %vm229, 0.0, %v641
  %v644 = vsel %vm229, 0.0, %v642
  %v645 = vld [vmem:[%s27] sm:$0xff]
  %v646 = vld [vmem:[%s27 + $0x8] sm:$0xff]
  %v647 = vld [vmem:[%s29] sm:$0xff]
  %v648 = vld [vmem:[%s29 + $0x8] sm:$0xff]
  %650 = vset.pattern.permute.xlu0 0
  %651 = vperm.xlu0 %650, %v647
  %v652 = vpop.permute.xlu0 %651
  %655 = vset.pattern.permute.xlu0 0
  %656 = vperm.xlu0 %655, %v648
  %v657 = vpop.permute.xlu0 %656
  %v660 = vsel %vm537, %v645, 0
  %v663 = vsel %vm537, %v646, 0
  %665 = vmatprep.subr.mxu0 0.0
  %666 = vmatpush1.msra.mxu0 %v633
  %667 = vmatprep.subr.mxu0 0.0
  %668 = vmatpush1.msra.mxu0 %v634
  %669 = vmatprep.subr.mxu0 0.0
  %670 = vmatpush1.msra.mxu0 %v621
  %671 = vmatprep.subr.mxu0 0.0
  %672 = vmatpush1.msra.mxu0 %v622
  %673 = vmatprep.subr.mxu0 0.0
  %674 = vmatpush1.msra.mxu0 %v643
  %675 = vmatprep.subr.mxu0 0.0
  %676 = vmatpush1.msra.mxu0 %v644
  %677 = vmatprep.subr.mxu0 0.0
  %678 = vmatpush1.msra.mxu0 0.0
  %679 = vmatprep.subr.mxu0 0.0
  %680 = vmatpush1.msra.mxu0 0.0
  %681 = vmatprep.subr.mxu0 0.0
  %682 = vmatpush1.msra.mxu0 0.0
  %683 = vmatprep.subr.mxu0 0.0
  %684 = vmatpush1.msra.mxu0 0.0
  %685 = vmatprep.subr.mxu0 0.0
  %686 = vmatpush1.msra.mxu0 0.0
  %687 = vmatprep.subr.mxu0 0.0
  %688 = vmatpush1.msra.mxu0 0.0
  %689 = vmatprep.subr.mxu0 0.0
  %690 = vmatpush1.msra.mxu0 0.0
  %691 = vmatprep.subr.mxu0 0.0
  %692 = vmatpush1.msra.mxu0 0.0
  %693 = vmatprep.subr.mxu0 0.0
  %694 = vmatpush1.msra.mxu0 0.0
  %695 = vmatprep.subr.mxu0 0.0
  %696 = vmatpush1.msra.mxu0 0.0
  %697 = vmatprep.subr.mxu0 0.0
  %698 = vmatpush1.msra.mxu0 0.0
  %699 = vmatprep.subr.mxu0 0.0
  %700 = vmatpush1.msra.mxu0 0.0
  %701 = vmatprep.subr.mxu0 0.0
  %702 = vmatpush1.msra.mxu0 0.0
  %703 = vmatprep.subr.mxu0 0.0
  %704 = vmatpush1.msra.mxu0 0.0
  %705 = vmatprep.subr.mxu0 0.0
  %706 = vmatpush1.msra.mxu0 0.0
  %707 = vmatprep.subr.mxu0 0.0
  %708 = vmatpush1.msra.mxu0 0.0
  %709 = vmatprep.subr.mxu0 0.0
  %710 = vmatpush1.msra.mxu0 0.0
  %711 = vmatprep.subr.mxu0 0.0
  %712 = vmatpush1.msra.mxu0 0.0
  %713 = vmatprep.subr.mxu0 0.0
  %714 = vmatpush1.msra.mxu0 0.0
  %715 = vmatprep.subr.mxu0 0.0
  %716 = vmatpush1.msra.mxu0 0.0
  %717 = vmatprep.subr.mxu0 0.0
  %718 = vmatpush1.msra.mxu0 0.0
  %719 = vmatprep.subr.mxu0 0.0
  %720 = vmatpush1.msra.mxu0 0.0
  %721 = vmatprep.subr.mxu0 0.0
  %722 = vmatpush1.msra.mxu0 0.0
  %723 = vmatprep.subr.mxu0 0.0
  %724 = vmatpush1.msra.mxu0 0.0
  %725 = vmatprep.subr.mxu0 0.0
  %726 = vmatpush1.msra.mxu0 0.0
  %727 = vmatprep.subr.mxu0 0.0
  %728 = vmatpush1.msra.mxu0 0.0
  %729 = vmatprep.mubr.f32.mxu0 0.0
  %730 = vmatmul.mubr.f32.gmra.mrb[0].mxu0 %v660
  %v731 = vpop.f32.mrb[0].mxu0
  %v732 = vadd.f32 %v652, %v731
  %v733 = vpop.f32.mrb[0].mxu0
  %734 = vmatprep.mubr.f32.mxu0 0.0
  %735 = vmatmul.mubr.f32.gmra.mrb[0].mxu0 %v663
  %v736 = vpop.f32.mrb[0].mxu0
  %v737 = vadd.f32 %v657, %v736
  %v738 = vpop.f32.mrb[0].mxu0
  %739 = vdwg.mxu0
  %v740 = vmax.f32 %v732, 0.0
  %v741 = vmax.f32 %v737, 0.0
  %v742 = vadd.f32 %v621, %v740
  %v743 = vadd.f32 %v622, %v741
  %746 = vrot.lane.b32.xlu0 %v742, 1
  %v747 = vpop.permute.xlu0 %746
  %748 = vrot.lane.b32.xlu0 %v743, 1
  %v749 = vpop.permute.xlu0 %748
  %v752 = vsel %vm188, 0.0, %v747
  %v753 = vsel %vm188, 0.0, %v749
  %v754 = vsel %vm196, 0.0, %v752
  %v755 = vsel %vm196, 0.0, %v753
  %756 = vrot.lane.b32.xlu0 %v742, 127
  %v757 = vpop.permute.xlu0 %756
  %758 = vrot.lane.b32.xlu0 %v743, 127
  %v759 = vpop.permute.xlu0 %758
  %v762 = vsel %vm221, %v757, 0.0
  %v763 = vsel %vm221, %v759, 0.0
  %v764 = vsel %vm229, 0.0, %v762
  %v765 = vsel %vm229, 0.0, %v763
  %v766 = vld [vmem:[%s23] sm:$0xff]
  %v767 = vld [vmem:[%s23 + $0x8] sm:$0xff]
  %v768 = vld [vmem:[%s25] sm:$0xff]
  %v769 = vld [vmem:[%s25 + $0x8] sm:$0xff]
  %771 = vset.pattern.permute.xlu0 0
  %772 = vperm.xlu0 %771, %v768
  %v773 = vpop.permute.xlu0 %772
  %776 = vset.pattern.permute.xlu0 0
  %777 = vperm.xlu0 %776, %v769
  %v778 = vpop.permute.xlu0 %777
  %v781 = vsel %vm537, %v766, 0
  %v784 = vsel %vm537, %v767, 0
  %786 = vmatprep.subr.mxu0 0.0
  %787 = vmatpush1.msra.mxu0 %v754
  %788 = vmatprep.subr.mxu0 0.0
  %789 = vmatpush1.msra.mxu0 %v755
  %790 = vmatprep.subr.mxu0 0.0
  %791 = vmatpush1.msra.mxu0 %v742
  %792 = vmatprep.subr.mxu0 0.0
  %793 = vmatpush1.msra.mxu0 %v743
  %794 = vmatprep.subr.mxu0 0.0
  %795 = vmatpush1.msra.mxu0 %v764
  %796 = vmatprep.subr.mxu0 0.0
  %797 = vmatpush1.msra.mxu0 %v765
  %798 = vmatprep.subr.mxu0 0.0
  %799 = vmatpush1.msra.mxu0 0.0
  %800 = vmatprep.subr.mxu0 0.0
  %801 = vmatpush1.msra.mxu0 0.0
  %802 = vmatprep.subr.mxu0 0.0
  %803 = vmatpush1.msra.mxu0 0.0
  %804 = vmatprep.subr.mxu0 0.0
  %805 = vmatpush1.msra.mxu0 0.0
  %806 = vmatprep.subr.mxu0 0.0
  %807 = vmatpush1.msra.mxu0 0.0
  %808 = vmatprep.subr.mxu0 0.0
  %809 = vmatpush1.msra.mxu0 0.0
  %810 = vmatprep.subr.mxu0 0.0
  %811 = vmatpush1.msra.mxu0 0.0
  %812 = vmatprep.subr.mxu0 0.0
  %813 = vmatpush1.msra.mxu0 0.0
  %814 = vmatprep.subr.mxu0 0.0
  %815 = vmatpush1.msra.mxu0 0.0
  %816 = vmatprep.subr.mxu0 0.0
  %817 = vmatpush1.msra.mxu0 0.0
  %818 = vmatprep.subr.mxu0 0.0
  %819 = vmatpush1.msra.mxu0 0.0
  %820 = vmatprep.subr.mxu0 0.0
  %821 = vmatpush1.msra.mxu0 0.0
  %822 = vmatprep.subr.mxu0 0.0
  %823 = vmatpush1.msra.mxu0 0.0
  %824 = vmatprep.subr.mxu0 0.0
  %825 = vmatpush1.msra.mxu0 0.0
  %826 = vmatprep.subr.mxu0 0.0
  %827 = vmatpush1.msra.mxu0 0.0
  %828 = vmatprep.subr.mxu0 0.0
  %829 = vmatpush1.msra.mxu0 0.0
  %830 = vmatprep.subr.mxu0 0.0
  %831 = vmatpush1.msra.mxu0 0.0
  %832 = vmatprep.subr.mxu0 0.0
  %833 = vmatpush1.msra.mxu0 0.0
  %834 = vmatprep.subr.mxu0 0.0
  %835 = vmatpush1.msra.mxu0 0.0
  %836 = vmatprep.subr.mxu0 0.0
  %837 = vmatpush1.msra.mxu0 0.0
  %838 = vmatprep.subr.mxu0 0.0
  %839 = vmatpush1.msra.mxu0 0.0
  %840 = vmatprep.subr.mxu0 0.0
  %841 = vmatpush1.msra.mxu0 0.0
  %842 = vmatprep.subr.mxu0 0.0
  %843 = vmatpush1.msra.mxu0 0.0
  %844 = vmatprep.subr.mxu0 0.0
  %845 = vmatpush1.msra.mxu0 0.0
  %846 = vmatprep.subr.mxu0 0.0
  %847 = vmatpush1.msra.mxu0 0.0
  %848 = vmatprep.subr.mxu0 0.0
  %849 = vmatpush1.msra.mxu0 0.0
  %850 = vmatprep.mubr.f32.mxu0 0.0
  %851 = vmatmul.mubr.f32.gmra.mrb[0].mxu0 %v781
  %v852 = vpop.f32.mrb[0].mxu0
  %v853 = vadd.f32 %v773, %v852
  %v854 = vpop.f32.mrb[0].mxu0
  %855 = vmatprep.mubr.f32.mxu0 0.0
  %856 = vmatmul.mubr.f32.gmra.mrb[0].mxu0 %v784
  %v857 = vpop.f32.mrb[0].mxu0
  %v858 = vadd.f32 %v778, %v857
  %v859 = vpop.f32.mrb[0].mxu0
  %860 = vdwg.mxu0
  %v861 = vmax.f32 %v853, 0.0
  %v862 = vmax.f32 %v858, 0.0
  %v863 = vld [vmem:[%s7] sm:$0xff]
  %v864 = vld [vmem:[%s7 + $0x8] sm:$0xff]
  %869 = vrot.lane.b32.xlu0 %v861, 1
  %v870 = vpop.permute.xlu0 %869
  %871 = vrot.lane.b32.xlu0 %v862, 1
  %v872 = vpop.permute.xlu0 %871
  %873 = vrot.lane.b32.xlu0 %v863, 1
  %v874 = vpop.permute.xlu0 %873
  %875 = vrot.lane.b32.xlu0 %v864, 1
  %v876 = vpop.permute.xlu0 %875
  %v881 = vsel %vm188, 0.0, %v870
  %v882 = vsel %vm188, 0.0, %v872
  %v883 = vsel %vm188, 0.0, %v874
  %v884 = vsel %vm188, 0.0, %v876
  %v885 = vsel %vm196, 0.0, %v881
  %v886 = vsel %vm196, 0.0, %v882
  %v887 = vsel %vm196, 0.0, %v883
  %v888 = vsel %vm196, 0.0, %v884
  %889 = vrot.lane.b32.xlu0 %v861, 127
  %v890 = vpop.permute.xlu0 %889
  %891 = vrot.lane.b32.xlu0 %v862, 127
  %v892 = vpop.permute.xlu0 %891
  %893 = vrot.lane.b32.xlu0 %v863, 127
  %v894 = vpop.permute.xlu0 %893
  %895 = vrot.lane.b32.xlu0 %v864, 127
  %v896 = vpop.permute.xlu0 %895
  %v901 = vsel %vm221, %v890, 0.0
  %v902 = vsel %vm221, %v892, 0.0
  %v903 = vsel %vm221, %v894, 0.0
  %v904 = vsel %vm221, %v896, 0.0
  %v905 = vsel %vm229, 0.0, %v901
  %v906 = vsel %vm229, 0.0, %v902
  %v907 = vsel %vm229, 0.0, %v903
  %v908 = vsel %vm229, 0.0, %v904
  %v909 = vld [vmem:[%s31] sm:$0xff]
  %v910 = vld [vmem:[%s31 + $0x8] sm:$0xff]
  %v911 = vld [vmem:[%s33] sm:$0xff]
  %v912 = vld [vmem:[%s33 + $0x8] sm:$0xff]
  %914 = vset.pattern.permute.xlu0 0
  %915 = vperm.xlu0 %914, %v911
  %v916 = vpop.permute.xlu0 %915
  %919 = vset.pattern.permute.xlu0 0
  %920 = vperm.xlu0 %919, %v912
  %v921 = vpop.permute.xlu0 %920
  %vm923 = vcmask 785408
  %v925 = vsel %vm923, %v909, 0
  %v928 = vsel %vm923, %v910, 0
  %930 = vmatprep.subr.mxu0 0.0
  %931 = vmatpush1.msra.mxu0 %v885
  %932 = vmatprep.subr.mxu0 0.0
  %933 = vmatpush1.msra.mxu0 %v886
  %934 = vmatprep.subr.mxu0 0.0
  %935 = vmatpush1.msra.mxu0 %v887
  %936 = vmatprep.subr.mxu0 0.0
  %937 = vmatpush1.msra.mxu0 %v888
  %938 = vmatprep.subr.mxu0 0.0
  %939 = vmatpush1.msra.mxu0 %v861
  %940 = vmatprep.subr.mxu0 0.0
  %941 = vmatpush1.msra.mxu0 %v862
  %942 = vmatprep.subr.mxu0 0.0
  %943 = vmatpush1.msra.mxu0 %v863
  %944 = vmatprep.subr.mxu0 0.0
  %945 = vmatpush1.msra.mxu0 %v864
  %946 = vmatprep.subr.mxu0 0.0
  %947 = vmatpush1.msra.mxu0 %v905
  %948 = vmatprep.subr.mxu0 0.0
  %949 = vmatpush1.msra.mxu0 %v906
  %950 = vmatprep.subr.mxu0 0.0
  %951 = vmatpush1.msra.mxu0 %v907
  %952 = vmatprep.subr.mxu0 0.0
  %953 = vmatpush1.msra.mxu0 %v908
  %954 = vmatprep.subr.mxu0 0.0
  %955 = vmatpush1.msra.mxu0 0.0
  %956 = vmatprep.subr.mxu0 0.0
  %957 = vmatpush1.msra.mxu0 0.0
  %958 = vmatprep.subr.mxu0 0.0
  %959 = vmatpush1.msra.mxu0 0.0
  %960 = vmatprep.subr.mxu0 0.0
  %961 = vmatpush1.msra.mxu0 0.0
  %962 = vmatprep.subr.mxu0 0.0
  %963 = vmatpush1.msra.mxu0 0.0
  %964 = vmatprep.subr.mxu0 0.0
  %965 = vmatpush1.msra.mxu0 0.0
  %966 = vmatprep.subr.mxu0 0.0
  %967 = vmatpush1.msra.mxu0 0.0
  %968 = vmatprep.subr.mxu0 0.0
  %969 = vmatpush1.msra.mxu0 0.0
  %970 = vmatprep.subr.mxu0 0.0
  %971 = vmatpush1.msra.mxu0 0.0
  %972 = vmatprep.subr.mxu0 0.0
  %973 = vmatpush1.msra.mxu0 0.0
  %974 = vmatprep.subr.mxu0 0.0
  %975 = vmatpush1.msra.mxu0 0.0
  %976 = vmatprep.subr.mxu0 0.0
  %977 = vmatpush1.msra.mxu0 0.0
  %978 = vmatprep.subr.mxu0 0.0
  %979 = vmatpush1.msra.mxu0 0.0
  %980 = vmatprep.subr.mxu0 0.0
  %981 = vmatpush1.msra.mxu0 0.0
  %982 = vmatprep.subr.mxu0 0.0
  %983 = vmatpush1.msra.mxu0 0.0
  %984 = vmatprep.subr.mxu0 0.0
  %985 = vmatpush1.msra.mxu0 0.0
  %986 = vmatprep.subr.mxu0 0.0
  %987 = vmatpush1.msra.mxu0 0.0
  %988 = vmatprep.subr.mxu0 0.0
  %989 = vmatpush1.msra.mxu0 0.0
  %990 = vmatprep.subr.mxu0 0.0
  %991 = vmatpush1.msra.mxu0 0.0
  %992 = vmatprep.subr.mxu0 0.0
  %993 = vmatpush1.msra.mxu0 0.0
  %994 = vmatprep.mubr.f32.mxu0 0.0
  %995 = vmatmul.mubr.f32.gmra.mrb[0].mxu0 %v925
  %v996 = vpop.f32.mrb[0].mxu0
  %v997 = vadd.f32 %v916, %v996
  %v998 = vpop.f32.mrb[0].mxu0
  %999 = vmatprep.mubr.f32.mxu0 0.0
  %1000 = vmatmul.mubr.f32.gmra.mrb[0].mxu0 %v928
  %v1001 = vpop.f32.mrb[0].mxu0
  %v1002 = vadd.f32 %v921, %v1001
  %v1003 = vpop.f32.mrb[0].mxu0
  %1004 = vdwg.mxu0
  %v1005 = vmax.f32 %v997, 0.0
  %v1006 = vmax.f32 %v1002, 0.0
  %1009 = vrot.lane.b32.xlu0 %v1005, 1
  %v1010 = vpop.permute.xlu0 %1009
  %1011 = vrot.lane.b32.xlu0 %v1006, 1
  %v1012 = vpop.permute.xlu0 %1011
  %v1015 = vsel %vm188, 0.0, %v1010
  %v1016 = vsel %vm188, 0.0, %v1012
  %v1017 = vsel %vm196, 0.0, %v1015
  %v1018 = vsel %vm196, 0.0, %v1016
  %1019 = vrot.lane.b32.xlu0 %v1005, 127
  %v1020 = vpop.permute.xlu0 %1019
  %1021 = vrot.lane.b32.xlu0 %v1006, 127
  %v1022 = vpop.permute.xlu0 %1021
  %v1025 = vsel %vm221, %v1020, 0.0
  %v1026 = vsel %vm221, %v1022, 0.0
  %v1027 = vsel %vm229, 0.0, %v1025
  %v1028 = vsel %vm229, 0.0, %v1026
  %v1029 = vld [vmem:[%s35] sm:$0xff]
  %v1030 = vld [vmem:[%s35 + $0x8] sm:$0xff]
  %v1031 = vld [vmem:[%s35 + $0x10] sm:$0xff]
  %v1032 = vld [vmem:[%s35 + $0x18] sm:$0xff]
  %v1033 = vld [vmem:[%s37] sm:$0xff]
  %v1034 = vld [vmem:[%s37 + $0x8] sm:$0xff]
  %1036 = vset.pattern.permute.xlu0 0
  %1037 = vperm.xlu0 %1036, %v1033
  %v1038 = vpop.permute.xlu0 %1037
  %1041 = vset.pattern.permute.xlu0 0
  %1042 = vperm.xlu0 %1041, %v1034
  %v1043 = vpop.permute.xlu0 %1042
  %v1046 = vsel %vm252, %v1030, 0
  %v1049 = vsel %vm252, %v1032, 0
  %1051 = vmatprep.subr.mxu0 0.0
  %1052 = vmatpush1.msra.mxu0 %v366
  %1053 = vmatprep.subr.mxu0 0.0
  %1054 = vmatpush1.msra.mxu0 %v367
  %1055 = vmatprep.subr.mxu0 0.0
  %1056 = vmatpush1.msra.mxu0 %v368
  %1057 = vmatprep.subr.mxu0 0.0
  %1058 = vmatpush1.msra.mxu0 %v369
  %1059 = vmatprep.subr.mxu0 0.0
  %1060 = vmatpush1.msra.mxu0 %v1017
  %1061 = vmatprep.subr.mxu0 0.0
  %1062 = vmatpush1.msra.mxu0 %v1018
  %1063 = vmatprep.subr.mxu0 0.0
  %1064 = vmatpush1.msra.mxu0 %v146
  %1065 = vmatprep.subr.mxu0 0.0
  %1066 = vmatpush1.msra.mxu0 %v147
  %1067 = vmatprep.subr.mxu0 0.0
  %1068 = vmatpush1.msra.mxu0 %v148
  %1069 = vmatprep.subr.mxu0 0.0
  %1070 = vmatpush1.msra.mxu0 %v149
  %1071 = vmatprep.subr.mxu0 0.0
  %1072 = vmatpush1.msra.mxu0 %v1005
  %1073 = vmatprep.subr.mxu0 0.0
  %1074 = vmatpush1.msra.mxu0 %v1006
  %1075 = vmatprep.subr.mxu0 0.0
  %1076 = vmatpush1.msra.mxu0 %v396
  %1077 = vmatprep.subr.mxu0 0.0
  %1078 = vmatpush1.msra.mxu0 %v397
  %1079 = vmatprep.subr.mxu0 0.0
  %1080 = vmatpush1.msra.mxu0 %v398
  %1081 = vmatprep.subr.mxu0 0.0
  %1082 = vmatpush1.msra.mxu0 %v399
  %1083 = vmatprep.subr.mxu0 0.0
  %1084 = vmatpush1.msra.mxu0 %v1027
  %1085 = vmatprep.subr.mxu0 0.0
  %1086 = vmatpush1.msra.mxu0 %v1028
  %1087 = vmatprep.subr.mxu0 0.0
  %1088 = vmatpush1.msra.mxu0 0.0
  %1089 = vmatprep.subr.mxu0 0.0
  %1090 = vmatpush1.msra.mxu0 0.0
  %1091 = vmatprep.subr.mxu0 0.0
  %1092 = vmatpush1.msra.mxu0 0.0
  %1093 = vmatprep.subr.mxu0 0.0
  %1094 = vmatpush1.msra.mxu0 0.0
  %1095 = vmatprep.subr.mxu0 0.0
  %1096 = vmatpush1.msra.mxu0 0.0
  %1097 = vmatprep.subr.mxu0 0.0
  %1098 = vmatpush1.msra.mxu0 0.0
  %1099 = vmatprep.subr.mxu0 0.0
  %1100 = vmatpush1.msra.mxu0 0.0
  %1101 = vmatprep.subr.mxu0 0.0
  %1102 = vmatpush1.msra.mxu0 0.0
  %1103 = vmatprep.subr.mxu0 0.0
  %1104 = vmatpush1.msra.mxu0 0.0
  %1105 = vmatprep.subr.mxu0 0.0
  %1106 = vmatpush1.msra.mxu0 0.0
  %1107 = vmatprep.subr.mxu0 0.0
  %1108 = vmatpush1.msra.mxu0 0.0
  %1109 = vmatprep.subr.mxu0 0.0
  %1110 = vmatpush1.msra.mxu0 0.0
  %1111 = vmatprep.subr.mxu0 0.0
  %1112 = vmatpush1.msra.mxu0 0.0
  %1113 = vmatprep.subr.mxu0 0.0
  %1114 = vmatpush1.msra.mxu0 0.0
  %1115 = vmatprep.mubr.f32.mxu0 %v1046
  %1116 = vmatmul.mubr.f32.gmra.mrb[0].mxu0 %v1029
  %v1117 = vpop.f32.mrb[0].mxu0
  %v1118 = vadd.f32 %v1038, %v1117
  %v1119 = vpop.f32.mrb[0].mxu0
  %1120 = vmatprep.mubr.f32.mxu0 %v1049
  %1121 = vmatmul.mubr.f32.gmra.mrb[0].mxu0 %v1031
  %v1122 = vpop.f32.mrb[0].mxu0
  %v1123 = vadd.f32 %v1043, %v1122
  %v1124 = vpop.f32.mrb[0].mxu0
  %1125 = vdwg.mxu0
  %v1126 = vmax.f32 %v1118, 0.0
  %v1127 = vmax.f32 %v1123, 0.0
  %1130 = vrot.lane.b32.xlu0 %v1126, 1
  %v1131 = vpop.permute.xlu0 %1130
  %1132 = vrot.lane.b32.xlu0 %v1127, 1
  %v1133 = vpop.permute.xlu0 %1132
  %v1136 = vsel %vm188, 0.0, %v1131
  %v1137 = vsel %vm188, 0.0, %v1133
  %v1138 = vsel %vm196, 0.0, %v1136
  %v1139 = vsel %vm196, 0.0, %v1137
  %1140 = vrot.lane.b32.xlu0 %v1126, 127
  %v1141 = vpop.permute.xlu0 %1140
  %1142 = vrot.lane.b32.xlu0 %v1127, 127
  %v1143 = vpop.permute.xlu0 %1142
  %v1146 = vsel %vm221, %v1141, 0.0
  %v1147 = vsel %vm221, %v1143, 0.0
  %v1148 = vsel %vm229, 0.0, %v1146
  %v1149 = vsel %vm229, 0.0, %v1147
  %v1150 = vld [vmem:[%s39] sm:$0xff]
  %v1151 = vld [vmem:[%s39 + $0x8] sm:$0xff]
  %v1152 = vld [vmem:[%s41] sm:$0xff]
  %v1153 = vld [vmem:[%s41 + $0x8] sm:$0xff]
  %1155 = vset.pattern.permute.xlu0 0
  %1156 = vperm.xlu0 %1155, %v1152
  %v1157 = vpop.permute.xlu0 %1156
  %1160 = vset.pattern.permute.xlu0 0
  %1161 = vperm.xlu0 %1160, %v1153
  %v1162 = vpop.permute.xlu0 %1161
  %v1165 = vsel %vm537, %v1150, 0
  %v1168 = vsel %vm537, %v1151, 0
  %1170 = vmatprep.subr.mxu0 0.0
  %1171 = vmatpush1.msra.mxu0 %v1138
  %1172 = vmatprep.subr.mxu0 0.0
  %1173 = vmatpush1.msra.mxu0 %v1139
  %1174 = vmatprep.subr.mxu0 0.0
  %1175 = vmatpush1.msra.mxu0 %v1126
  %1176 = vmatprep.subr.mxu0 0.0
  %1177 = vmatpush1.msra.mxu0 %v1127
  %1178 = vmatprep.subr.mxu0 0.0
  %1179 = vmatpush1.msra.mxu0 %v1148
  %1180 = vmatprep.subr.mxu0 0.0
  %1181 = vmatpush1.msra.mxu0 %v1149
  %1182 = vmatprep.subr.mxu0 0.0
  %1183 = vmatpush1.msra.mxu0 0.0
  %1184 = vmatprep.subr.mxu0 0.0
  %1185 = vmatpush1.msra.mxu0 0.0
  %1186 = vmatprep.subr.mxu0 0.0
  %1187 = vmatpush1.msra.mxu0 0.0
  %1188 = vmatprep.subr.mxu0 0.0
  %1189 = vmatpush1.msra.mxu0 0.0
  %1190 = vmatprep.subr.mxu0 0.0
  %1191 = vmatpush1.msra.mxu0 0.0
  %1192 = vmatprep.subr.mxu0 0.0
  %1193 = vmatpush1.msra.mxu0 0.0
  %1194 = vmatprep.subr.mxu0 0.0
  %1195 = vmatpush1.msra.mxu0 0.0
  %1196 = vmatprep.subr.mxu0 0.0
  %1197 = vmatpush1.msra.mxu0 0.0
  %1198 = vmatprep.subr.mxu0 0.0
  %1199 = vmatpush1.msra.mxu0 0.0
  %1200 = vmatprep.subr.mxu0 0.0
  %1201 = vmatpush1.msra.mxu0 0.0
  %1202 = vmatprep.subr.mxu0 0.0
  %1203 = vmatpush1.msra.mxu0 0.0
  %1204 = vmatprep.subr.mxu0 0.0
  %1205 = vmatpush1.msra.mxu0 0.0
  %1206 = vmatprep.subr.mxu0 0.0
  %1207 = vmatpush1.msra.mxu0 0.0
  %1208 = vmatprep.subr.mxu0 0.0
  %1209 = vmatpush1.msra.mxu0 0.0
  %1210 = vmatprep.subr.mxu0 0.0
  %1211 = vmatpush1.msra.mxu0 0.0
  %1212 = vmatprep.subr.mxu0 0.0
  %1213 = vmatpush1.msra.mxu0 0.0
  %1214 = vmatprep.subr.mxu0 0.0
  %1215 = vmatpush1.msra.mxu0 0.0
  %1216 = vmatprep.subr.mxu0 0.0
  %1217 = vmatpush1.msra.mxu0 0.0
  %1218 = vmatprep.subr.mxu0 0.0
  %1219 = vmatpush1.msra.mxu0 0.0
  %1220 = vmatprep.subr.mxu0 0.0
  %1221 = vmatpush1.msra.mxu0 0.0
  %1222 = vmatprep.subr.mxu0 0.0
  %1223 = vmatpush1.msra.mxu0 0.0
  %1224 = vmatprep.subr.mxu0 0.0
  %1225 = vmatpush1.msra.mxu0 0.0
  %1226 = vmatprep.subr.mxu0 0.0
  %1227 = vmatpush1.msra.mxu0 0.0
  %1228 = vmatprep.subr.mxu0 0.0
  %1229 = vmatpush1.msra.mxu0 0.0
  %1230 = vmatprep.subr.mxu0 0.0
  %1231 = vmatpush1.msra.mxu0 0.0
  %1232 = vmatprep.subr.mxu0 0.0
  %1233 = vmatpush1.msra.mxu0 0.0
  %1234 = vmatprep.mubr.f32.mxu0 0.0
  %1235 = vmatmul.mubr.f32.gmra.mrb[0].mxu0 %v1165
  %v1236 = vpop.f32.mrb[0].mxu0
  %v1237 = vadd.f32 %v1157, %v1236
  %v1238 = vpop.f32.mrb[0].mxu0
  %1239 = vmatprep.mubr.f32.mxu0 0.0
  %1240 = vmatmul.mubr.f32.gmra.mrb[0].mxu0 %v1168
  %v1241 = vpop.f32.mrb[0].mxu0
  %v1242 = vadd.f32 %v1162, %v1241
  %v1243 = vpop.f32.mrb[0].mxu0
  %1244 = vdwg.mxu0
  %v1245 = vadd.f32 %v1005, %v1237
  %v1246 = vadd.f32 %v1006, %v1242
  %v1247 = vmax.f32 %v1245, 0.0
  %v1248 = vmax.f32 %v1246, 0.0
  %1251 = vrot.lane.b32.xlu0 %v1247, 1
  %v1252 = vpop.permute.xlu0 %1251
  %1253 = vrot.lane.b32.xlu0 %v1248, 1
  %v1254 = vpop.permute.xlu0 %1253
  %v1257 = vsel %vm188, 0.0, %v1252
  %v1258 = vsel %vm188, 0.0, %v1254
  %v1259 = vsel %vm196, 0.0, %v1257
  %v1260 = vsel %vm196, 0.0, %v1258
  %1261 = vrot.lane.b32.xlu0 %v1247, 127
  %v1262 = vpop.permute.xlu0 %1261
  %1263 = vrot.lane.b32.xlu0 %v1248, 127
  %v1264 = vpop.permute.xlu0 %1263
  %v1267 = vsel %vm221, %v1262, 0.0
  %v1268 = vsel %vm221, %v1264, 0.0
  %v1269 = vsel %vm229, 0.0, %v1267
  %v1270 = vsel %vm229, 0.0, %v1268
  %v1271 = vld [vmem:[%s47] sm:$0xff]
  %v1272 = vld [vmem:[%s47 + $0x8] sm:$0xff]
  %v1273 = vld [vmem:[%s49] sm:$0xff]
  %v1274 = vld [vmem:[%s49 + $0x8] sm:$0xff]
  %1276 = vset.pattern.permute.xlu0 0
  %1277 = vperm.xlu0 %1276, %v1273
  %v1278 = vpop.permute.xlu0 %1277
  %1281 = vset.pattern.permute.xlu0 0
  %1282 = vperm.xlu0 %1281, %v1274
  %v1283 = vpop.permute.xlu0 %1282
  %v1286 = vsel %vm537, %v1271, 0
  %v1289 = vsel %vm537, %v1272, 0
  %1291 = vmatprep.subr.mxu0 0.0
  %1292 = vmatpush1.msra.mxu0 %v1259
  %1293 = vmatprep.subr.mxu0 0.0
  %1294 = vmatpush1.msra.mxu0 %v1260
  %1295 = vmatprep.subr.mxu0 0.0
  %1296 = vmatpush1.msra.mxu0 %v1247
  %1297 = vmatprep.subr.mxu0 0.0
  %1298 = vmatpush1.msra.mxu0 %v1248
  %1299 = vmatprep.subr.mxu0 0.0
  %1300 = vmatpush1.msra.mxu0 %v1269
  %1301 = vmatprep.subr.mxu0 0.0
  %1302 = vmatpush1.msra.mxu0 %v1270
  %1303 = vmatprep.subr.mxu0 0.0
  %1304 = vmatpush1.msra.mxu0 0.0
  %1305 = vmatprep.subr.mxu0 0.0
  %1306 = vmatpush1.msra.mxu0 0.0
  %1307 = vmatprep.subr.mxu0 0.0
  %1308 = vmatpush1.msra.mxu0 0.0
  %1309 = vmatprep.subr.mxu0 0.0
  %1310 = vmatpush1.msra.mxu0 0.0
  %1311 = vmatprep.subr.mxu0 0.0
  %1312 = vmatpush1.msra.mxu0 0.0
  %1313 = vmatprep.subr.mxu0 0.0
  %1314 = vmatpush1.msra.mxu0 0.0
  %1315 = vmatprep.subr.mxu0 0.0
  %1316 = vmatpush1.msra.mxu0 0.0
  %1317 = vmatprep.subr.mxu0 0.0
  %1318 = vmatpush1.msra.mxu0 0.0
  %1319 = vmatprep.subr.mxu0 0.0
  %1320 = vmatpush1.msra.mxu0 0.0
  %1321 = vmatprep.subr.mxu0 0.0
  %1322 = vmatpush1.msra.mxu0 0.0
  %1323 = vmatprep.subr.mxu0 0.0
  %1324 = vmatpush1.msra.mxu0 0.0
  %1325 = vmatprep.subr.mxu0 0.0
  %1326 = vmatpush1.msra.mxu0 0.0
  %1327 = vmatprep.subr.mxu0 0.0
  %1328 = vmatpush1.msra.mxu0 0.0
  %1329 = vmatprep.subr.mxu0 0.0
  %1330 = vmatpush1.msra.mxu0 0.0
  %1331 = vmatprep.subr.mxu0 0.0
  %1332 = vmatpush1.msra.mxu0 0.0
  %1333 = vmatprep.subr.mxu0 0.0
  %1334 = vmatpush1.msra.mxu0 0.0
  %1335 = vmatprep.subr.mxu0 0.0
  %1336 = vmatpush1.msra.mxu0 0.0
  %1337 = vmatprep.subr.mxu0 0.0
  %1338 = vmatpush1.msra.mxu0 0.0
  %1339 = vmatprep.subr.mxu0 0.0
  %1340 = vmatpush1.msra.mxu0 0.0
  %1341 = vmatprep.subr.mxu0 0.0
  %1342 = vmatpush1.msra.mxu0 0.0
  %1343 = vmatprep.subr.mxu0 0.0
  %1344 = vmatpush1.msra.mxu0 0.0
  %1345 = vmatprep.subr.mxu0 0.0
  %1346 = vmatpush1.msra.mxu0 0.0
  %1347 = vmatprep.subr.mxu0 0.0
  %1348 = vmatpush1.msra.mxu0 0.0
  %1349 = vmatprep.subr.mxu0 0.0
  %1350 = vmatpush1.msra.mxu0 0.0
  %1351 = vmatprep.subr.mxu0 0.0
  %1352 = vmatpush1.msra.mxu0 0.0
  %1353 = vmatprep.subr.mxu0 0.0
  %1354 = vmatpush1.msra.mxu0 0.0
  %1355 = vmatprep.mubr.f32.mxu0 0.0
  %1356 = vmatmul.mubr.f32.gmra.mrb[0].mxu0 %v1286
  %v1357 = vpop.f32.mrb[0].mxu0
  %v1358 = vadd.f32 %v1278, %v1357
  %v1359 = vpop.f32.mrb[0].mxu0
  %1360 = vmatprep.mubr.f32.mxu0 0.0
  %1361 = vmatmul.mubr.f32.gmra.mrb[0].mxu0 %v1289
  %v1362 = vpop.f32.mrb[0].mxu0
  %v1363 = vadd.f32 %v1283, %v1362
  %v1364 = vpop.f32.mrb[0].mxu0
  %1365 = vdwg.mxu0
  %v1366 = vmax.f32 %v1358, 0.0
  %v1367 = vmax.f32 %v1363, 0.0
  %v1368 = vadd.f32 %v1247, %v1366
  %v1369 = vadd.f32 %v1248, %v1367
  %1372 = vrot.lane.b32.xlu0 %v1368, 1
  %v1373 = vpop.permute.xlu0 %1372
  %1374 = vrot.lane.b32.xlu0 %v1369, 1
  %v1375 = vpop.permute.xlu0 %1374
  %v1378 = vsel %vm188, 0.0, %v1373
  %v1379 = vsel %vm188, 0.0, %v1375
  %v1380 = vsel %vm196, 0.0, %v1378
  %v1381 = vsel %vm196, 0.0, %v1379
  %1382 = vrot.lane.b32.xlu0 %v1368, 127
  %v1383 = vpop.permute.xlu0 %1382
  %1384 = vrot.lane.b32.xlu0 %v1369, 127
  %v1385 = vpop.permute.xlu0 %1384
  %v1388 = vsel %vm221, %v1383, 0.0
  %v1389 = vsel %vm221, %v1385, 0.0
  %v1390 = vsel %vm229, 0.0, %v1388
  %v1391 = vsel %vm229, 0.0, %v1389
  %v1392 = vld [vmem:[%s43] sm:$0xff]
  %v1393 = vld [vmem:[%s43 + $0x8] sm:$0xff]
  %v1394 = vld [vmem:[%s45] sm:$0xff]
  %v1395 = vld [vmem:[%s45 + $0x8] sm:$0xff]
  %1397 = vset.pattern.permute.xlu0 0
  %1398 = vperm.xlu0 %1397, %v1394
  %v1399 = vpop.permute.xlu0 %1398
  %1402 = vset.pattern.permute.xlu0 0
  %1403 = vperm.xlu0 %1402, %v1395
  %v1404 = vpop.permute.xlu0 %1403
  %v1407 = vsel %vm537, %v1392, 0
  %v1410 = vsel %vm537, %v1393, 0
  %1412 = vmatprep.subr.mxu0 0.0
  %1413 = vmatpush1.msra.mxu0 %v1380
  %1414 = vmatprep.subr.mxu0 0.0
  %1415 = vmatpush1.msra.mxu0 %v1381
  %1416 = vmatprep.subr.mxu0 0.0
  %1417 = vmatpush1.msra.mxu0 %v1368
  %1418 = vmatprep.subr.mxu0 0.0
  %1419 = vmatpush1.msra.mxu0 %v1369
  %1420 = vmatprep.subr.mxu0 0.0
  %1421 = vmatpush1.msra.mxu0 %v1390
  %1422 = vmatprep.subr.mxu0 0.0
  %1423 = vmatpush1.msra.mxu0 %v1391
  %1424 = vmatprep.subr.mxu0 0.0
  %1425 = vmatpush1.msra.mxu0 0.0
  %1426 = vmatprep.subr.mxu0 0.0
  %1427 = vmatpush1.msra.mxu0 0.0
  %1428 = vmatprep.subr.mxu0 0.0
  %1429 = vmatpush1.msra.mxu0 0.0
  %1430 = vmatprep.subr.mxu0 0.0
  %1431 = vmatpush1.msra.mxu0 0.0
  %1432 = vmatprep.subr.mxu0 0.0
  %1433 = vmatpush1.msra.mxu0 0.0
  %1434 = vmatprep.subr.mxu0 0.0
  %1435 = vmatpush1.msra.mxu0 0.0
  %1436 = vmatprep.subr.mxu0 0.0
  %1437 = vmatpush1.msra.mxu0 0.0
  %1438 = vmatprep.subr.mxu0 0.0
  %1439 = vmatpush1.msra.mxu0 0.0
  %1440 = vmatprep.subr.mxu0 0.0
  %1441 = vmatpush1.msra.mxu0 0.0
  %1442 = vmatprep.subr.mxu0 0.0
  %1443 = vmatpush1.msra.mxu0 0.0
  %1444 = vmatprep.subr.mxu0 0.0
  %1445 = vmatpush1.msra.mxu0 0.0
  %1446 = vmatprep.subr.mxu0 0.0
  %1447 = vmatpush1.msra.mxu0 0.0
  %1448 = vmatprep.subr.mxu0 0.0
  %1449 = vmatpush1.msra.mxu0 0.0
  %1450 = vmatprep.subr.mxu0 0.0
  %1451 = vmatpush1.msra.mxu0 0.0
  %1452 = vmatprep.subr.mxu0 0.0
  %1453 = vmatpush1.msra.mxu0 0.0
  %1454 = vmatprep.subr.mxu0 0.0
  %1455 = vmatpush1.msra.mxu0 0.0
  %1456 = vmatprep.subr.mxu0 0.0
  %1457 = vmatpush1.msra.mxu0 0.0
  %1458 = vmatprep.subr.mxu0 0.0
  %1459 = vmatpush1.msra.mxu0 0.0
  %1460 = vmatprep.subr.mxu0 0.0
  %1461 = vmatpush1.msra.mxu0 0.0
  %1462 = vmatprep.subr.mxu0 0.0
  %1463 = vmatpush1.msra.mxu0 0.0
  %1464 = vmatprep.subr.mxu0 0.0
  %1465 = vmatpush1.msra.mxu0 0.0
  %1466 = vmatprep.subr.mxu0 0.0
  %1467 = vmatpush1.msra.mxu0 0.0
  %1468 = vmatprep.subr.mxu0 0.0
  %1469 = vmatpush1.msra.mxu0 0.0
  %1470 = vmatprep.subr.mxu0 0.0
  %1471 = vmatpush1.msra.mxu0 0.0
  %1472 = vmatprep.subr.mxu0 0.0
  %1473 = vmatpush1.msra.mxu0 0.0
  %1474 = vmatprep.subr.mxu0 0.0
  %1475 = vmatpush1.msra.mxu0 0.0
  %1476 = vmatprep.mubr.f32.mxu0 0.0
  %1477 = vmatmul.mubr.f32.gmra.mrb[0].mxu0 %v1407
  %v1478 = vpop.f32.mrb[0].mxu0
  %v1479 = vadd.f32 %v1399, %v1478
  %v1480 = vpop.f32.mrb[0].mxu0
  %1481 = vmatprep.mubr.f32.mxu0 0.0
  %1482 = vmatmul.mubr.f32.gmra.mrb[0].mxu0 %v1410
  %v1483 = vpop.f32.mrb[0].mxu0
  %v1484 = vadd.f32 %v1404, %v1483
  %v1485 = vpop.f32.mrb[0].mxu0
  %1486 = vdwg.mxu0
  %v1487 = vmax.f32 %v1479, 0.0
  %v1488 = vmax.f32 %v1484, 0.0
  %v1489 = vld [vmem:[%s9] sm:$0xff]
  %v1490 = vld [vmem:[%s9 + $0x8] sm:$0xff]
  %1495 = vrot.lane.b32.xlu0 %v1487, 1
  %v1496 = vpop.permute.xlu0 %1495
  %1497 = vrot.lane.b32.xlu0 %v1488, 1
  %v1498 = vpop.permute.xlu0 %1497
  %1499 = vrot.lane.b32.xlu0 %v1489, 1
  %v1500 = vpop.permute.xlu0 %1499
  %1501 = vrot.lane.b32.xlu0 %v1490, 1
  %v1502 = vpop.permute.xlu0 %1501
  %v1507 = vsel %vm188, 0.0, %v1496
  %v1508 = vsel %vm188, 0.0, %v1498
  %v1509 = vsel %vm188, 0.0, %v1500
  %v1510 = vsel %vm188, 0.0, %v1502
  %v1511 = vsel %vm196, 0.0, %v1507
  %v1512 = vsel %vm196, 0.0, %v1508
  %v1513 = vsel %vm196, 0.0, %v1509
  %v1514 = vsel %vm196, 0.0, %v1510
  %1515 = vrot.lane.b32.xlu0 %v1487, 127
  %v1516 = vpop.permute.xlu0 %1515
  %1517 = vrot.lane.b32.xlu0 %v1488, 127
  %v1518 = vpop.permute.xlu0 %1517
  %1519 = vrot.lane.b32.xlu0 %v1489, 127
  %v1520 = vpop.permute.xlu0 %1519
  %1521 = vrot.lane.b32.xlu0 %v1490, 127
  %v1522 = vpop.permute.xlu0 %1521
  %v1527 = vsel %vm221, %v1516, 0.0
  %v1528 = vsel %vm221, %v1518, 0.0
  %v1529 = vsel %vm221, %v1520, 0.0
  %v1530 = vsel %vm221, %v1522, 0.0
  %v1531 = vsel %vm229, 0.0, %v1527
  %v1532 = vsel %vm229, 0.0, %v1528
  %v1533 = vsel %vm229, 0.0, %v1529
  %v1534 = vsel %vm229, 0.0, %v1530
  %v1535 = vld [vmem:[%s51] sm:$0xff]
  %v1536 = vld [vmem:[%s51 + $0x8] sm:$0xff]
  %v1537 = vld [vmem:[%s53] sm:$0xff]
  %v1538 = vld [vmem:[%s53 + $0x8] sm:$0xff]
  %1540 = vset.pattern.permute.xlu0 0
  %1541 = vperm.xlu0 %1540, %v1537
  %v1542 = vpop.permute.xlu0 %1541
  %1545 = vset.pattern.permute.xlu0 0
  %1546 = vperm.xlu0 %1545, %v1538
  %v1547 = vpop.permute.xlu0 %1546
  %v1550 = vsel %vm923, %v1535, 0
  %v1553 = vsel %vm923, %v1536, 0
  %1555 = vmatprep.subr.mxu0 0.0
  %1556 = vmatpush1.msra.mxu0 %v1511
  %1557 = vmatprep.subr.mxu0 0.0
  %1558 = vmatpush1.msra.mxu0 %v1512
  %1559 = vmatprep.subr.mxu0 0.0
  %1560 = vmatpush1.msra.mxu0 %v1513
  %1561 = vmatprep.subr.mxu0 0.0
  %1562 = vmatpush1.msra.mxu0 %v1514
  %1563 = vmatprep.subr.mxu0 0.0
  %1564 = vmatpush1.msra.mxu0 %v1487
  %1565 = vmatprep.subr.mxu0 0.0
  %1566 = vmatpush1.msra.mxu0 %v1488
  %1567 = vmatprep.subr.mxu0 0.0
  %1568 = vmatpush1.msra.mxu0 %v1489
  %1569 = vmatprep.subr.mxu0 0.0
  %1570 = vmatpush1.msra.mxu0 %v1490
  %1571 = vmatprep.subr.mxu0 0.0
  %1572 = vmatpush1.msra.mxu0 %v1531
  %1573 = vmatprep.subr.mxu0 0.0
  %1574 = vmatpush1.msra.mxu0 %v1532
  %1575 = vmatprep.subr.mxu0 0.0
  %1576 = vmatpush1.msra.mxu0 %v1533
  %1577 = vmatprep.subr.mxu0 0.0
  %1578 = vmatpush1.msra.mxu0 %v1534
  %1579 = vmatprep.subr.mxu0 0.0
  %1580 = vmatpush1.msra.mxu0 0.0
  %1581 = vmatprep.subr.mxu0 0.0
  %1582 = vmatpush1.msra.mxu0 0.0
  %1583 = vmatprep.subr.mxu0 0.0
  %1584 = vmatpush1.msra.mxu0 0.0
  %1585 = vmatprep.subr.mxu0 0.0
  %1586 = vmatpush1.msra.mxu0 0.0
  %1587 = vmatprep.subr.mxu0 0.0
  %1588 = vmatpush1.msra.mxu0 0.0
  %1589 = vmatprep.subr.mxu0 0.0
  %1590 = vmatpush1.msra.mxu0 0.0
  %1591 = vmatprep.subr.mxu0 0.0
  %1592 = vmatpush1.msra.mxu0 0.0
  %1593 = vmatprep.subr.mxu0 0.0
  %1594 = vmatpush1.msra.mxu0 0.0
  %1595 = vmatprep.subr.mxu0 0.0
  %1596 = vmatpush1.msra.mxu0 0.0
  %1597 = vmatprep.subr.mxu0 0.0
  %1598 = vmatpush1.msra.mxu0 0.0
  %1599 = vmatprep.subr.mxu0 0.0
  %1600 = vmatpush1.msra.mxu0 0.0
  %1601 = vmatprep.subr.mxu0 0.0
  %1602 = vmatpush1.msra.mxu0 0.0
  %1603 = vmatprep.subr.mxu0 0.0
  %1604 = vmatpush1.msra.mxu0 0.0
  %1605 = vmatprep.subr.mxu0 0.0
  %1606 = vmatpush1.msra.mxu0 0.0
  %1607 = vmatprep.subr.mxu0 0.0
  %1608 = vmatpush1.msra.mxu0 0.0
  %1609 = vmatprep.subr.mxu0 0.0
  %1610 = vmatpush1.msra.mxu0 0.0
  %1611 = vmatprep.subr.mxu0 0.0
  %1612 = vmatpush1.msra.mxu0 0.0
  %1613 = vmatprep.subr.mxu0 0.0
  %1614 = vmatpush1.msra.mxu0 0.0
  %1615 = vmatprep.subr.mxu0 0.0
  %1616 = vmatpush1.msra.mxu0 0.0
  %1617 = vmatprep.subr.mxu0 0.0
  %1618 = vmatpush1.msra.mxu0 0.0
  %1619 = vmatprep.mubr.f32.mxu0 0.0
  %1620 = vmatmul.mubr.f32.gmra.mrb[0].mxu0 %v1550
  %v1621 = vpop.f32.mrb[0].mxu0
  %v1622 = vadd.f32 %v1542, %v1621
  %v1623 = vpop.f32.mrb[0].mxu0
  %1624 = vmatprep.mubr.f32.mxu0 0.0
  %1625 = vmatmul.mubr.f32.gmra.mrb[0].mxu0 %v1553
  %v1626 = vpop.f32.mrb[0].mxu0
  %v1627 = vadd.f32 %v1547, %v1626
  %v1628 = vpop.f32.mrb[0].mxu0
  %1629 = vdwg.mxu0
  %v1630 = vmax.f32 %v1622, 0.0
  %v1631 = vmax.f32 %v1627, 0.0
  %1634 = vrot.lane.b32.xlu0 %v1630, 1
  %v1635 = vpop.permute.xlu0 %1634
  %1636 = vrot.lane.b32.xlu0 %v1631, 1
  %v1637 = vpop.permute.xlu0 %1636
  %v1640 = vsel %vm188, 0.0, %v1635
  %v1641 = vsel %vm188, 0.0, %v1637
  %v1642 = vsel %vm196, 0.0, %v1640
  %v1643 = vsel %vm196, 0.0, %v1641
  %1644 = vrot.lane.b32.xlu0 %v1630, 127
  %v1645 = vpop.permute.xlu0 %1644
  %1646 = vrot.lane.b32.xlu0 %v1631, 127
  %v1647 = vpop.permute.xlu0 %1646
  %v1650 = vsel %vm221, %v1645, 0.0
  %v1651 = vsel %vm221, %v1647, 0.0
  %v1652 = vsel %vm229, 0.0, %v1650
  %v1653 = vsel %vm229, 0.0, %v1651
  %v1654 = vld [vmem:[%s55] sm:$0xff]
  %v1655 = vld [vmem:[%s55 + $0x8] sm:$0xff]
  %v1656 = vld [vmem:[%s55 + $0x10] sm:$0xff]
  %v1657 = vld [vmem:[%s55 + $0x18] sm:$0xff]
  %v1658 = vld [vmem:[%s57] sm:$0xff]
  %v1659 = vld [vmem:[%s57 + $0x8] sm:$0xff]
  %1661 = vset.pattern.permute.xlu0 0
  %1662 = vperm.xlu0 %1661, %v1658
  %v1663 = vpop.permute.xlu0 %1662
  %1666 = vset.pattern.permute.xlu0 0
  %1667 = vperm.xlu0 %1666, %v1659
  %v1668 = vpop.permute.xlu0 %1667
  %v1671 = vsel %vm252, %v1655, 0
  %v1674 = vsel %vm252, %v1657, 0
  %1676 = vmatprep.subr.mxu0 0.0
  %1677 = vmatpush1.msra.mxu0 %v366
  %1678 = vmatprep.subr.mxu0 0.0
  %1679 = vmatpush1.msra.mxu0 %v367
  %1680 = vmatprep.subr.mxu0 0.0
  %1681 = vmatpush1.msra.mxu0 %v368
  %1682 = vmatprep.subr.mxu0 0.0
  %1683 = vmatpush1.msra.mxu0 %v369
  %1684 = vmatprep.subr.mxu0 0.0
  %1685 = vmatpush1.msra.mxu0 %v1642
  %1686 = vmatprep.subr.mxu0 0.0
  %1687 = vmatpush1.msra.mxu0 %v1643
  %1688 = vmatprep.subr.mxu0 0.0
  %1689 = vmatpush1.msra.mxu0 %v146
  %1690 = vmatprep.subr.mxu0 0.0
  %1691 = vmatpush1.msra.mxu0 %v147
  %1692 = vmatprep.subr.mxu0 0.0
  %1693 = vmatpush1.msra.mxu0 %v148
  %1694 = vmatprep.subr.mxu0 0.0
  %1695 = vmatpush1.msra.mxu0 %v149
  %1696 = vmatprep.subr.mxu0 0.0
  %1697 = vmatpush1.msra.mxu0 %v1630
  %1698 = vmatprep.subr.mxu0 0.0
  %1699 = vmatpush1.msra.mxu0 %v1631
  %1700 = vmatprep.subr.mxu0 0.0
  %1701 = vmatpush1.msra.mxu0 %v396
  %1702 = vmatprep.subr.mxu0 0.0
  %1703 = vmatpush1.msra.mxu0 %v397
  %1704 = vmatprep.subr.mxu0 0.0
  %1705 = vmatpush1.msra.mxu0 %v398
  %1706 = vmatprep.subr.mxu0 0.0
  %1707 = vmatpush1.msra.mxu0 %v399
  %1708 = vmatprep.subr.mxu0 0.0
  %1709 = vmatpush1.msra.mxu0 %v1652
  %1710 = vmatprep.subr.mxu0 0.0
  %1711 = vmatpush1.msra.mxu0 %v1653
  %1712 = vmatprep.subr.mxu0 0.0
  %1713 = vmatpush1.msra.mxu0 0.0
  %1714 = vmatprep.subr.mxu0 0.0
  %1715 = vmatpush1.msra.mxu0 0.0
  %1716 = vmatprep.subr.mxu0 0.0
  %1717 = vmatpush1.msra.mxu0 0.0
  %1718 = vmatprep.subr.mxu0 0.0
  %1719 = vmatpush1.msra.mxu0 0.0
  %1720 = vmatprep.subr.mxu0 0.0
  %1721 = vmatpush1.msra.mxu0 0.0
  %1722 = vmatprep.subr.mxu0 0.0
  %1723 = vmatpush1.msra.mxu0 0.0
  %1724 = vmatprep.subr.mxu0 0.0
  %1725 = vmatpush1.msra.mxu0 0.0
  %1726 = vmatprep.subr.mxu0 0.0
  %1727 = vmatpush1.msra.mxu0 0.0
  %1728 = vmatprep.subr.mxu0 0.0
  %1729 = vmatpush1.msra.mxu0 0.0
  %1730 = vmatprep.subr.mxu0 0.0
  %1731 = vmatpush1.msra.mxu0 0.0
  %1732 = vmatprep.subr.mxu0 0.0
  %1733 = vmatpush1.msra.mxu0 0.0
  %1734 = vmatprep.subr.mxu0 0.0
  %1735 = vmatpush1.msra.mxu0 0.0
  %1736 = vmatprep.subr.mxu0 0.0
  %1737 = vmatpush1.msra.mxu0 0.0
  %1738 = vmatprep.subr.mxu0 0.0
  %1739 = vmatpush1.msra.mxu0 0.0
  %1740 = vmatprep.mubr.f32.mxu0 %v1671
  %1741 = vmatmul.mubr.f32.gmra.mrb[0].mxu0 %v1654
  %v1742 = vpop.f32.mrb[0].mxu0
  %v1743 = vadd.f32 %v1663, %v1742
  %v1744 = vpop.f32.mrb[0].mxu0
  %1745 = vmatprep.mubr.f32.mxu0 %v1674
  %1746 = vmatmul.mubr.f32.gmra.mrb[0].mxu0 %v1656
  %v1747 = vpop.f32.mrb[0].mxu0
  %v1748 = vadd.f32 %v1668, %v1747
  %v1749 = vpop.f32.mrb[0].mxu0
  %1750 = vdwg.mxu0
  %v1751 = vmax.f32 %v1743, 0.0
  %v1752 = vmax.f32 %v1748, 0.0
  %1755 = vrot.lane.b32.xlu0 %v1751, 1
  %v1756 = vpop.permute.xlu0 %1755
  %1757 = vrot.lane.b32.xlu0 %v1752, 1
  %v1758 = vpop.permute.xlu0 %1757
  %v1761 = vsel %vm188, 0.0, %v1756
  %v1762 = vsel %vm188, 0.0, %v1758
  %v1763 = vsel %vm196, 0.0, %v1761
  %v1764 = vsel %vm196, 0.0, %v1762
  %1765 = vrot.lane.b32.xlu0 %v1751, 127
  %v1766 = vpop.permute.xlu0 %1765
  %1767 = vrot.lane.b32.xlu0 %v1752, 127
  %v1768 = vpop.permute.xlu0 %1767
  %v1771 = vsel %vm221, %v1766, 0.0
  %v1772 = vsel %vm221, %v1768, 0.0
  %v1773 = vsel %vm229, 0.0, %v1771
  %v1774 = vsel %vm229, 0.0, %v1772
  %v1775 = vld [vmem:[%s59] sm:$0xff]
  %v1776 = vld [vmem:[%s59 + $0x8] sm:$0xff]
  %v1777 = vld [vmem:[%s61] sm:$0xff]
  %v1778 = vld [vmem:[%s61 + $0x8] sm:$0xff]
  %1780 = vset.pattern.permute.xlu0 0
  %1781 = vperm.xlu0 %1780, %v1777
  %v1782 = vpop.permute.xlu0 %1781
  %1785 = vset.pattern.permute.xlu0 0
  %1786 = vperm.xlu0 %1785, %v1778
  %v1787 = vpop.permute.xlu0 %1786
  %v1790 = vsel %vm537, %v1775, 0
  %v1793 = vsel %vm537, %v1776, 0
  %1795 = vmatprep.subr.mxu0 0.0
  %1796 = vmatpush1.msra.mxu0 %v1763
  %1797 = vmatprep.subr.mxu0 0.0
  %1798 = vmatpush1.msra.mxu0 %v1764
  %1799 = vmatprep.subr.mxu0 0.0
  %1800 = vmatpush1.msra.mxu0 %v1751
  %1801 = vmatprep.subr.mxu0 0.0
  %1802 = vmatpush1.msra.mxu0 %v1752
  %1803 = vmatprep.subr.mxu0 0.0
  %1804 = vmatpush1.msra.mxu0 %v1773
  %1805 = vmatprep.subr.mxu0 0.0
  %1806 = vmatpush1.msra.mxu0 %v1774
  %1807 = vmatprep.subr.mxu0 0.0
  %1808 = vmatpush1.msra.mxu0 0.0
  %1809 = vmatprep.subr.mxu0 0.0
  %1810 = vmatpush1.msra.mxu0 0.0
  %1811 = vmatprep.subr.mxu0 0.0
  %1812 = vmatpush1.msra.mxu0 0.0
  %1813 = vmatprep.subr.mxu0 0.0
  %1814 = vmatpush1.msra.mxu0 0.0
  %1815 = vmatprep.subr.mxu0 0.0
  %1816 = vmatpush1.msra.mxu0 0.0
  %1817 = vmatprep.subr.mxu0 0.0
  %1818 = vmatpush1.msra.mxu0 0.0
  %1819 = vmatprep.subr.mxu0 0.0
  %1820 = vmatpush1.msra.mxu0 0.0
  %1821 = vmatprep.subr.mxu0 0.0
  %1822 = vmatpush1.msra.mxu0 0.0
  %1823 = vmatprep.subr.mxu0 0.0
  %1824 = vmatpush1.msra.mxu0 0.0
  %1825 = vmatprep.subr.mxu0 0.0
  %1826 = vmatpush1.msra.mxu0 0.0
  %1827 = vmatprep.subr.mxu0 0.0
  %1828 = vmatpush1.msra.mxu0 0.0
  %1829 = vmatprep.subr.mxu0 0.0
  %1830 = vmatpush1.msra.mxu0 0.0
  %1831 = vmatprep.subr.mxu0 0.0
  %1832 = vmatpush1.msra.mxu0 0.0
  %1833 = vmatprep.subr.mxu0 0.0
  %1834 = vmatpush1.msra.mxu0 0.0
  %1835 = vmatprep.subr.mxu0 0.0
  %1836 = vmatpush1.msra.mxu0 0.0
  %1837 = vmatprep.subr.mxu0 0.0
  %1838 = vmatpush1.msra.mxu0 0.0
  %1839 = vmatprep.subr.mxu0 0.0
  %1840 = vmatpush1.msra.mxu0 0.0
  %1841 = vmatprep.subr.mxu0 0.0
  %1842 = vmatpush1.msra.mxu0 0.0
  %1843 = vmatprep.subr.mxu0 0.0
  %1844 = vmatpush1.msra.mxu0 0.0
  %1845 = vmatprep.subr.mxu0 0.0
  %1846 = vmatpush1.msra.mxu0 0.0
  %1847 = vmatprep.subr.mxu0 0.0
  %1848 = vmatpush1.msra.mxu0 0.0
  %1849 = vmatprep.subr.mxu0 0.0
  %1850 = vmatpush1.msra.mxu0 0.0
  %1851 = vmatprep.subr.mxu0 0.0
  %1852 = vmatpush1.msra.mxu0 0.0
  %1853 = vmatprep.subr.mxu0 0.0
  %1854 = vmatpush1.msra.mxu0 0.0
  %1855 = vmatprep.subr.mxu0 0.0
  %1856 = vmatpush1.msra.mxu0 0.0
  %1857 = vmatprep.subr.mxu0 0.0
  %1858 = vmatpush1.msra.mxu0 0.0
  %1859 = vmatprep.mubr.f32.mxu0 0.0
  %1860 = vmatmul.mubr.f32.gmra.mrb[0].mxu0 %v1790
  %v1861 = vpop.f32.mrb[0].mxu0
  %v1862 = vadd.f32 %v1782, %v1861
  %v1863 = vpop.f32.mrb[0].mxu0
  %1864 = vmatprep.mubr.f32.mxu0 0.0
  %1865 = vmatmul.mubr.f32.gmra.mrb[0].mxu0 %v1793
  %v1866 = vpop.f32.mrb[0].mxu0
  %v1867 = vadd.f32 %v1787, %v1866
  %v1868 = vpop.f32.mrb[0].mxu0
  %1869 = vdwg.mxu0
  %v1870 = vadd.f32 %v1630, %v1862
  %v1871 = vadd.f32 %v1631, %v1867
  %v1872 = vmax.f32 %v1870, 0.0
  %v1873 = vmax.f32 %v1871, 0.0
  %1876 = vrot.lane.b32.xlu0 %v1872, 1
  %v1877 = vpop.permute.xlu0 %1876
  %1878 = vrot.lane.b32.xlu0 %v1873, 1
  %v1879 = vpop.permute.xlu0 %1878
  %v1882 = vsel %vm188, 0.0, %v1877
  %v1883 = vsel %vm188, 0.0, %v1879
  %v1884 = vsel %vm196, 0.0, %v1882
  %v1885 = vsel %vm196, 0.0, %v1883
  %1886 = vrot.lane.b32.xlu0 %v1872, 127
  %v1887 = vpop.permute.xlu0 %1886
  %1888 = vrot.lane.b32.xlu0 %v1873, 127
  %v1889 = vpop.permute.xlu0 %1888
  %v1892 = vsel %vm221, %v1887, 0.0
  %v1893 = vsel %vm221, %v1889, 0.0
  %v1894 = vsel %vm229, 0.0, %v1892
  %v1895 = vsel %vm229, 0.0, %v1893
  %v1896 = vld [vmem:[%s67] sm:$0xff]
  %v1897 = vld [vmem:[%s67 + $0x8] sm:$0xff]
  %v1898 = vld [vmem:[%s69] sm:$0xff]
  %v1899 = vld [vmem:[%s69 + $0x8] sm:$0xff]
  %1901 = vset.pattern.permute.xlu0 0
  %1902 = vperm.xlu0 %1901, %v1898
  %v1903 = vpop.permute.xlu0 %1902
  %1906 = vset.pattern.permute.xlu0 0
  %1907 = vperm.xlu0 %1906, %v1899
  %v1908 = vpop.permute.xlu0 %1907
  %v1911 = vsel %vm537, %v1896, 0
  %v1914 = vsel %vm537, %v1897, 0
  %1916 = vmatprep.subr.mxu0 0.0
  %1917 = vmatpush1.msra.mxu0 %v1884
  %1918 = vmatprep.subr.mxu0 0.0
  %1919 = vmatpush1.msra.mxu0 %v1885
  %1920 = vmatprep.subr.mxu0 0.0
  %1921 = vmatpush1.msra.mxu0 %v1872
  %1922 = vmatprep.subr.mxu0 0.0
  %1923 = vmatpush1.msra.mxu0 %v1873
  %1924 = vmatprep.subr.mxu0 0.0
  %1925 = vmatpush1.msra.mxu0 %v1894
  %1926 = vmatprep.subr.mxu0 0.0
  %1927 = vmatpush1.msra.mxu0 %v1895
  %1928 = vmatprep.subr.mxu0 0.0
  %1929 = vmatpush1.msra.mxu0 0.0
  %1930 = vmatprep.subr.mxu0 0.0
  %1931 = vmatpush1.msra.mxu0 0.0
  %1932 = vmatprep.subr.mxu0 0.0
  %1933 = vmatpush1.msra.mxu0 0.0
  %1934 = vmatprep.subr.mxu0 0.0
  %1935 = vmatpush1.msra.mxu0 0.0
  %1936 = vmatprep.subr.mxu0 0.0
  %1937 = vmatpush1.msra.mxu0 0.0
  %1938 = vmatprep.subr.mxu0 0.0
  %1939 = vmatpush1.msra.mxu0 0.0
  %1940 = vmatprep.subr.mxu0 0.0
  %1941 = vmatpush1.msra.mxu0 0.0
  %1942 = vmatprep.subr.mxu0 0.0
  %1943 = vmatpush1.msra.mxu0 0.0
  %1944 = vmatprep.subr.mxu0 0.0
  %1945 = vmatpush1.msra.mxu0 0.0
  %1946 = vmatprep.subr.mxu0 0.0
  %1947 = vmatpush1.msra.mxu0 0.0
  %1948 = vmatprep.subr.mxu0 0.0
  %1949 = vmatpush1.msra.mxu0 0.0
  %1950 = vmatprep.subr.mxu0 0.0
  %1951 = vmatpush1.msra.mxu0 0.0
  %1952 = vmatprep.subr.mxu0 0.0
  %1953 = vmatpush1.msra.mxu0 0.0
  %1954 = vmatprep.subr.mxu0 0.0
  %1955 = vmatpush1.msra.mxu0 0.0
  %1956 = vmatprep.subr.mxu0 0.0
  %1957 = vmatpush1.msra.mxu0 0.0
  %1958 = vmatprep.subr.mxu0 0.0
  %1959 = vmatpush1.msra.mxu0 0.0
  %1960 = vmatprep.subr.mxu0 0.0
  %1961 = vmatpush1.msra.mxu0 0.0
  %1962 = vmatprep.subr.mxu0 0.0
  %1963 = vmatpush1.msra.mxu0 0.0
  %1964 = vmatprep.subr.mxu0 0.0
  %1965 = vmatpush1.msra.mxu0 0.0
  %1966 = vmatprep.subr.mxu0 0.0
  %1967 = vmatpush1.msra.mxu0 0.0
  %1968 = vmatprep.subr.mxu0 0.0
  %1969 = vmatpush1.msra.mxu0 0.0
  %1970 = vmatprep.subr.mxu0 0.0
  %1971 = vmatpush1.msra.mxu0 0.0
  %1972 = vmatprep.subr.mxu0 0.0
  %1973 = vmatpush1.msra.mxu0 0.0
  %1974 = vmatprep.subr.mxu0 0.0
  %1975 = vmatpush1.msra.mxu0 0.0
  %1976 = vmatprep.subr.mxu0 0.0
  %1977 = vmatpush1.msra.mxu0 0.0
  %1978 = vmatprep.subr.mxu0 0.0
  %1979 = vmatpush1.msra.mxu0 0.0
  %1980 = vmatprep.mubr.f32.mxu0 0.0
  %1981 = vmatmul.mubr.f32.gmra.mrb[0].mxu0 %v1911
  %v1982 = vpop.f32.mrb[0].mxu0
  %v1983 = vadd.f32 %v1903, %v1982
  %v1984 = vpop.f32.mrb[0].mxu0
  %1985 = vmatprep.mubr.f32.mxu0 0.0
  %1986 = vmatmul.mubr.f32.gmra.mrb[0].mxu0 %v1914
  %v1987 = vpop.f32.mrb[0].mxu0
  %v1988 = vadd.f32 %v1908, %v1987
  %v1989 = vpop.f32.mrb[0].mxu0
  %1990 = vdwg.mxu0
  %v1991 = vmax.f32 %v1983, 0.0
  %v1992 = vmax.f32 %v1988, 0.0
  %v1993 = vadd.f32 %v1872, %v1991
  %v1994 = vadd.f32 %v1873, %v1992
  %1997 = vrot.lane.b32.xlu0 %v1993, 1
  %v1998 = vpop.permute.xlu0 %1997
  %1999 = vrot.lane.b32.xlu0 %v1994, 1
  %v2000 = vpop.permute.xlu0 %1999
  %v2003 = vsel %vm188, 0.0, %v1998
  %v2004 = vsel %vm188, 0.0, %v2000
  %v2005 = vsel %vm196, 0.0, %v2003
  %v2006 = vsel %vm196, 0.0, %v2004
  %2007 = vrot.lane.b32.xlu0 %v1993, 127
  %v2008 = vpop.permute.xlu0 %2007
  %2009 = vrot.lane.b32.xlu0 %v1994, 127
  %v2010 = vpop.permute.xlu0 %2009
  %v2013 = vsel %vm221, %v2008, 0.0
  %v2014 = vsel %vm221, %v2010, 0.0
  %v2015 = vsel %vm229, 0.0, %v2013
  %v2016 = vsel %vm229, 0.0, %v2014
  %v2017 = vld [vmem:[%s63] sm:$0xff]
  %v2018 = vld [vmem:[%s63 + $0x8] sm:$0xff]
  %v2019 = vld [vmem:[%s65] sm:$0xff]
  %v2020 = vld [vmem:[%s65 + $0x8] sm:$0xff]
  %2022 = vset.pattern.permute.xlu0 0
  %2023 = vperm.xlu0 %2022, %v2019
  %v2024 = vpop.permute.xlu0 %2023
  %2027 = vset.pattern.permute.xlu0 0
  %2028 = vperm.xlu0 %2027, %v2020
  %v2029 = vpop.permute.xlu0 %2028
  %v2032 = vsel %vm537, %v2017, 0
  %v2035 = vsel %vm537, %v2018, 0
  %2037 = vmatprep.subr.mxu0 0.0
  %2038 = vmatpush1.msra.mxu0 %v2005
  %2039 = vmatprep.subr.mxu0 0.0
  %2040 = vmatpush1.msra.mxu0 %v2006
  %2041 = vmatprep.subr.mxu0 0.0
  %2042 = vmatpush1.msra.mxu0 %v1993
  %2043 = vmatprep.subr.mxu0 0.0
  %2044 = vmatpush1.msra.mxu0 %v1994
  %2045 = vmatprep.subr.mxu0 0.0
  %2046 = vmatpush1.msra.mxu0 %v2015
  %2047 = vmatprep.subr.mxu0 0.0
  %2048 = vmatpush1.msra.mxu0 %v2016
  %2049 = vmatprep.subr.mxu0 0.0
  %2050 = vmatpush1.msra.mxu0 0.0
  %2051 = vmatprep.subr.mxu0 0.0
  %2052 = vmatpush1.msra.mxu0 0.0
  %2053 = vmatprep.subr.mxu0 0.0
  %2054 = vmatpush1.msra.mxu0 0.0
  %2055 = vmatprep.subr.mxu0 0.0
  %2056 = vmatpush1.msra.mxu0 0.0
  %2057 = vmatprep.subr.mxu0 0.0
  %2058 = vmatpush1.msra.mxu0 0.0
  %2059 = vmatprep.subr.mxu0 0.0
  %2060 = vmatpush1.msra.mxu0 0.0
  %2061 = vmatprep.subr.mxu0 0.0
  %2062 = vmatpush1.msra.mxu0 0.0
  %2063 = vmatprep.subr.mxu0 0.0
  %2064 = vmatpush1.msra.mxu0 0.0
  %2065 = vmatprep.subr.mxu0 0.0
  %2066 = vmatpush1.msra.mxu0 0.0
  %2067 = vmatprep.subr.mxu0 0.0
  %2068 = vmatpush1.msra.mxu0 0.0
  %2069 = vmatprep.subr.mxu0 0.0
  %2070 = vmatpush1.msra.mxu0 0.0
  %2071 = vmatprep.subr.mxu0 0.0
  %2072 = vmatpush1.msra.mxu0 0.0
  %2073 = vmatprep.subr.mxu0 0.0
  %2074 = vmatpush1.msra.mxu0 0.0
  %2075 = vmatprep.subr.mxu0 0.0
  %2076 = vmatpush1.msra.mxu0 0.0
  %2077 = vmatprep.subr.mxu0 0.0
  %2078 = vmatpush1.msra.mxu0 0.0
  %2079 = vmatprep.subr.mxu0 0.0
  %2080 = vmatpush1.msra.mxu0 0.0
  %2081 = vmatprep.subr.mxu0 0.0
  %2082 = vmatpush1.msra.mxu0 0.0
  %2083 = vmatprep.subr.mxu0 0.0
  %2084 = vmatpush1.msra.mxu0 0.0
  %2085 = vmatprep.subr.mxu0 0.0
  %2086 = vmatpush1.msra.mxu0 0.0
  %2087 = vmatprep.subr.mxu0 0.0
  %2088 = vmatpush1.msra.mxu0 0.0
  %2089 = vmatprep.subr.mxu0 0.0
  %2090 = vmatpush1.msra.mxu0 0.0
  %2091 = vmatprep.subr.mxu0 0.0
  %2092 = vmatpush1.msra.mxu0 0.0
  %2093 = vmatprep.subr.mxu0 0.0
  %2094 = vmatpush1.msra.mxu0 0.0
  %2095 = vmatprep.subr.mxu0 0.0
  %2096 = vmatpush1.msra.mxu0 0.0
  %2097 = vmatprep.subr.mxu0 0.0
  %2098 = vmatpush1.msra.mxu0 0.0
  %2099 = vmatprep.subr.mxu0 0.0
  %2100 = vmatpush1.msra.mxu0 0.0
  %2101 = vmatprep.mubr.f32.mxu0 0.0
  %2102 = vmatmul.mubr.f32.gmra.mrb[0].mxu0 %v2032
  %v2103 = vpop.f32.mrb[0].mxu0
  %v2104 = vadd.f32 %v2024, %v2103
  %v2105 = vpop.f32.mrb[0].mxu0
  %2106 = vmatprep.mubr.f32.mxu0 0.0
  %2107 = vmatmul.mubr.f32.gmra.mrb[0].mxu0 %v2035
  %v2108 = vpop.f32.mrb[0].mxu0
  %v2109 = vadd.f32 %v2029, %v2108
  %v2110 = vpop.f32.mrb[0].mxu0
  %2111 = vdwg.mxu0
  %v2112 = vmax.f32 %v2104, 0.0
  %v2113 = vmax.f32 %v2109, 0.0
  %vm2114 = vcmask 261120
  %2115 = vst.msk [vmem:[%s71] sm:$0xff] %vm2114, %v2112
  %2116 = vst.msk [vmem:[%s71 + $0x8] sm:$0xff] %vm2114, %v2113
  // Predicated region
  $region142: #{single_signal_up.1} parent=0 // pred_check
    _
  $region143: #{single_signal_up.1} parent=0 // pred_check_branch
    %2118 = sbr.rel (0) target = $region145
  $region144: #{single_signal_up.1} parent=0 // pred_region
    _
  $region145: #{single_signal_up.1} parent=0 // pred_fallthru
    _
  // Predicated region
  $region146: #{single_signal_up.1} parent=0 // pred_check
    _
  $region147: #{single_signal_up.1} parent=0 // pred_check_branch
    %2120 = sbr.rel (0) target = $region149
  $region148: #{single_signal_up.1} parent=0 // pred_region
    _
  $region149: #{single_signal_up.1} parent=0 // pred_fallthru
    _

</llo_original>
